<compile_context>
chip_gen: v5e
topology: v5e:2x2
jax: 0.10.0
libtpu: 0.0.40
codegen_flags: <defaults>
</compile_context>

<pallas_src>
from functools import partial

import jax
import jax.numpy as jnp
from jax import lax
from jax.experimental import pallas as pl
from jax.experimental.pallas import tpu as pltpu


_CHUNK = 1024        # rows per in-kernel chunk (live set stays in vregs)
_MAX_TILE = 65536    # rows per grid step; ~8 MiB double-buffered (sublane-padded)

_HIGHEST = jax.lax.Precision.HIGHEST


def irisnet_kernel(xT_ref, w1_ref, b1_ref, w2_ref, b2_ref, o_ref):
    # xT_ref: (Fin, tile)   feature-major input block (f32 or bf16)
    # w1_ref: (Hid, Fin)    fc1.weight (PyTorch layout), f32, VMEM-resident
    # b1_ref: (Hid, 1)
    # w2_ref: (Fout, Hid)   fc2.weight
    # b2_ref: (Fout, 1)
    # o_ref : (Fout, tile)  feature-major output block (lane-dense), f32

    # Hoisted, loop-invariant weight/bias loads (once per grid step).
    w1 = w1_ref[...]
    b1 = b1_ref[...]
    w2 = w2_ref[...]
    b2 = b2_ref[...]

    _, tile = xT_ref.shape
    chunk = min(_CHUNK, tile)
    n_chunks = tile // chunk

    def compute_chunk(start):
        xc = xT_ref[:, pl.ds(start, chunk)].astype(jnp.float32)    # (Fin, chunk)
        # fc1 on the MXU (f32 accumulate); VALU only does bias-add / ReLU.
        h = jnp.dot(w1, xc, preferred_element_type=jnp.float32,
                    precision=_HIGHEST) + b1
        h = jnp.maximum(h, 0.0)                                     # ReLU
        # fc2 on the MXU.
        y = jnp.dot(w2, h, preferred_element_type=jnp.float32,
                    precision=_HIGHEST) + b2
        o_ref[:, pl.ds(start, chunk)] = y.astype(o_ref.dtype)

    if n_chunks == 1:
        compute_chunk(0)
    else:
        def body(c, carry):
            compute_chunk(pl.multiple_of(c * chunk, chunk))
            return carry
        lax.fori_loop(0, n_chunks, body, 0, unroll=2)


def _pick_tiling(B):
    """Batch tile (multiple of _CHUNK) and padded batch size."""
    rows = pl.cdiv(B, _CHUNK) * _CHUNK
    if rows <= _CHUNK:
        n_steps = 1
    else:
        # >= 2 grid steps so the "parallel" axis can shard over v7x's two TCs.
        n_steps = max(2, pl.cdiv(rows, _MAX_TILE))
    tile = pl.cdiv(pl.cdiv(rows, n_steps), _CHUNK) * _CHUNK
    padded_B = pl.cdiv(rows, tile) * tile
    return tile, padded_B


@partial(jax.jit, static_argnames=("stream_dtype",))
def irisnet_forward_feature_major(xT, w1, b1, w2, b2, *,
                                  stream_dtype=jnp.float32):
    """Preferred entry point: xT (4, B) feature-major -> (3, B). No transposes."""
    Fin, B = xT.shape
    Hid = w1.shape[0]
    Fout = w2.shape[0]

    tile, padded_B = _pick_tiling(B)
    grid = (padded_B // tile,)

    xT_pad = jnp.pad(xT.astype(stream_dtype), ((0, 0), (0, padded_B - B)))
    b1c = b1.reshape(Hid, 1).astype(jnp.float32)
    b2c = b2.reshape(Fout, 1).astype(jnp.float32)
    in_itemsize = jnp.dtype(stream_dtype).itemsize

    yT = pl.pallas_call(
        irisnet_kernel,
        out_shape=jax.ShapeDtypeStruct((Fout, padded_B), jnp.float32),
        grid=grid,
        in_specs=[
            pl.BlockSpec((Fin, tile), lambda i: (0, i)),   # xT: tiled over batch
            pl.BlockSpec((Hid, Fin), lambda i: (0, 0)),    # w1: VMEM-resident
            pl.BlockSpec((Hid, 1), lambda i: (0, 0)),      # b1
            pl.BlockSpec((Fout, Hid), lambda i: (0, 0)),   # w2
            pl.BlockSpec((Fout, 1), lambda i: (0, 0)),     # b2
        ],
        out_specs=pl.BlockSpec((Fout, tile), lambda i: (0, i)),
        compiler_params=pltpu.CompilerParams(
            dimension_semantics=("parallel",),
            vmem_limit_bytes=32 * 1024 * 1024,
        ),
        cost_estimate=pl.CostEstimate(
            flops=2 * padded_B * (Fin * Hid + Hid * Fout) + padded_B * Hid,
            transcendentals=0,
            bytes_accessed=(padded_B * Fin * in_itemsize
                            + padded_B * Fout * 4
                            + 4 * (Hid * Fin + Hid + Fout * Hid + Fout)),
        ),
    )(xT_pad, w1.astype(jnp.float32), b1c, w2.astype(jnp.float32), b2c)

    return yT[:, :B]


@partial(jax.jit, static_argnames=("stream_dtype",))
def irisnet_forward(x, w1, b1, w2, b2, *, stream_dtype=jnp.float32):
    """nn.Module-compatible signature: x (B, 4) -> (B, 3).

    The pad/transpose stays inside this single jit so XLA fuses it into one
    copy; use irisnet_forward_feature_major directly to avoid it entirely.
    """
    yT = irisnet_forward_feature_major(x.T, w1, b1, w2, b2,
                                       stream_dtype=stream_dtype)
    return yT.T


def init_params(key):
    # nn.Linear-style shapes: fc1.weight (10, 4), fc1.bias (10,),
    #                         fc2.weight (3, 10), fc2.bias (3,).
    k1, k2, k3, k4 = jax.random.split(key, 4)
    w1 = jax.random.normal(k1, (10, 4), dtype=jnp.float32) * 0.5
    b1 = jax.random.normal(k2, (10,), dtype=jnp.float32) * 0.1
    w2 = jax.random.normal(k3, (3, 10), dtype=jnp.float32) * 0.5
    b2 = jax.random.normal(k4, (3,), dtype=jnp.float32) * 0.1
    return w1, b1, w2, b2


def reference_forward(x, w1, b1, w2, b2):
    h = jnp.maximum(jnp.dot(x, w1.T, precision=_HIGHEST) + b1, 0.0)
    return jnp.dot(h, w2.T, precision=_HIGHEST) + b2


if __name__ == "__main__":
    key = jax.random.PRNGKey(0)
    kx, kp = jax.random.split(key)
    w1, b1, w2, b2 = init_params(kp)

    # Small batch: single grid step, single in-kernel chunk.
    batch = 8
    x = jax.random.normal(kx, (batch, 4), dtype=jnp.float32)
    out = jax.block_until_ready(irisnet_forward(x, w1, b1, w2, b2))
    ref = reference_forward(x, w1, b1, w2, b2)
    assert out.shape == (batch, 3)
    assert jnp.allclose(out, ref, atol=1e-4, rtol=1e-4)

    # Larger batch: multi-step grid + in-kernel chunk loop + padding slice-off.
    batch2 = 2500
    x2 = jax.random.normal(kx, (batch2, 4), dtype=jnp.float32)
    out2 = jax.block_until_ready(irisnet_forward(x2, w1, b1, w2, b2))
    ref2 = reference_forward(x2, w1, b1, w2, b2)
    assert out2.shape == (batch2, 3)
    assert jnp.allclose(out2, ref2, atol=1e-4, rtol=1e-4)

    # bf16 input streaming path (halves input HBM bytes; f32 accumulate).
    out_bf16 = jax.block_until_ready(
        irisnet_forward(x, w1, b1, w2, b2, stream_dtype=jnp.bfloat16))
    assert out_bf16.shape == (batch, 3)
    assert bool(jnp.all(jnp.isfinite(out_bf16)))
    assert float(jnp.max(jnp.abs(out_bf16 - ref))) < 0.5  # input-quantization bound

    print("KERNEL_OK")
</pallas_src>

<mosaic_0001>
module attributes {stable_mosaic.version = 11 : i64} {
  func.func @irisnet_kernel(%arg0: i32, %arg1: memref<4x1024xf32, #tpu.memory_space<vmem>>, %arg2: memref<10x4xf32, #tpu.memory_space<vmem>>, %arg3: memref<10x1xf32, #tpu.memory_space<vmem>>, %arg4: memref<3x10xf32, #tpu.memory_space<vmem>>, %arg5: memref<3x1xf32, #tpu.memory_space<vmem>>, %arg6: memref<3x1024xf32, #tpu.memory_space<vmem>>) attributes {dimension_semantics = [#tpu.dimension_semantics<parallel>], iteration_bounds = array<i64: 1>, scalar_prefetch = 0 : i64, scratch_operands = 0 : i64, tpu.core_type = #tpu.core_type<tc>, window_params = [{transform_indices = @transform_0, window_bounds = array<i64: 4, 1024>}, {pipeline_mode = #tpu.pipeline_mode<synchronous>, transform_indices = @transform_1, window_bounds = array<i64: 10, 4>}, {pipeline_mode = #tpu.pipeline_mode<synchronous>, transform_indices = @transform_2, window_bounds = array<i64: 10, 1>}, {pipeline_mode = #tpu.pipeline_mode<synchronous>, transform_indices = @transform_3, window_bounds = array<i64: 3, 10>}, {pipeline_mode = #tpu.pipeline_mode<synchronous>, transform_indices = @transform_4, window_bounds = array<i64: 3, 1>}, {transform_indices = @transform_5, window_bounds = array<i64: 3, 1024>}]} {
    %c0 = arith.constant 0 : index
    %c0_0 = arith.constant 0 : index
    %0 = vector.load %arg2[%c0, %c0_0] : memref<10x4xf32, #tpu.memory_space<vmem>>, vector<10x4xf32>
    %c0_1 = arith.constant 0 : index
    %c0_2 = arith.constant 0 : index
    %1 = vector.load %arg3[%c0_1, %c0_2] : memref<10x1xf32, #tpu.memory_space<vmem>>, vector<10x1xf32>
    %c0_3 = arith.constant 0 : index
    %c0_4 = arith.constant 0 : index
    %2 = vector.load %arg4[%c0_3, %c0_4] : memref<3x10xf32, #tpu.memory_space<vmem>>, vector<3x10xf32>
    %c0_5 = arith.constant 0 : index
    %c0_6 = arith.constant 0 : index
    %3 = vector.load %arg5[%c0_5, %c0_6] : memref<3x1xf32, #tpu.memory_space<vmem>>, vector<3x1xf32>
    %c0_7 = arith.constant 0 : index
    %c0_8 = arith.constant 0 : index
    %4 = vector.load %arg1[%c0_7, %c0_8] : memref<4x1024xf32, #tpu.memory_space<vmem>>, vector<4x1024xf32>
    %cst = arith.constant dense<0.000000e+00> : vector<10x1024xf32>
    %5 = tpu.matmul %0, %4, %cst {dimension_numbers = #tpu.dot_dimension_numbers<[1], [0], [0], [1], [0, 0, 1, 1], [], []>, precision = #tpu.contract_precision<fp32>} : vector<10x4xf32>, vector<4x1024xf32>, vector<10x1024xf32> -> vector<10x1024xf32>
    %6 = vector.broadcast %1 : vector<10x1xf32> to vector<10x1024xf32>
    %7 = arith.addf %5, %6 : vector<10x1024xf32>
    %cst_9 = arith.constant 0.000000e+00 : f32
    %8 = vector.broadcast %cst_9 : f32 to vector<10x1024xf32>
    %9 = arith.maximumf %7, %8 : vector<10x1024xf32>
    %cst_10 = arith.constant dense<0.000000e+00> : vector<3x1024xf32>
    %10 = tpu.matmul %2, %9, %cst_10 {dimension_numbers = #tpu.dot_dimension_numbers<[1], [0], [0], [1], [0, 0, 1, 1], [], []>, precision = #tpu.contract_precision<fp32>} : vector<3x10xf32>, vector<10x1024xf32>, vector<3x1024xf32> -> vector<3x1024xf32>
    %11 = vector.broadcast %3 : vector<3x1xf32> to vector<3x1024xf32>
    %12 = arith.addf %10, %11 : vector<3x1024xf32>
    %c0_11 = arith.constant 0 : index
    %c0_12 = arith.constant 0 : index
    %13 = vector.load %arg6[%c0_11, %c0_12] : memref<3x1024xf32, #tpu.memory_space<vmem>>, vector<3x1024xf32>
    tpu.vector_store %arg6[%c0_11, %c0_12], %12 {strides = array<i32>} : memref<3x1024xf32, #tpu.memory_space<vmem>>, vector<3x1024xf32>,
    return
  }
  func.func @transform_0(%arg0: i32) -> (i32, i32) {
    %c0_i32 = arith.constant 0 : i32
    %c0_i32_0 = arith.constant 0 : i32
    return %c0_i32, %arg0 : i32, i32
  }
  func.func @transform_1(%arg0: i32) -> (i32, i32) {
    %c0_i32 = arith.constant 0 : i32
    %c0_i32_0 = arith.constant 0 : i32
    %c0_i32_1 = arith.constant 0 : i32
    return %c0_i32, %c0_i32_0 : i32, i32
  }
  func.func @transform_2(%arg0: i32) -> (i32, i32) {
    %c0_i32 = arith.constant 0 : i32
    %c0_i32_0 = arith.constant 0 : i32
    %c0_i32_1 = arith.constant 0 : i32
    return %c0_i32, %c0_i32_0 : i32, i32
  }
  func.func @transform_3(%arg0: i32) -> (i32, i32) {
    %c0_i32 = arith.constant 0 : i32
    %c0_i32_0 = arith.constant 0 : i32
    %c0_i32_1 = arith.constant 0 : i32
    return %c0_i32, %c0_i32_0 : i32, i32
  }
  func.func @transform_4(%arg0: i32) -> (i32, i32) {
    %c0_i32 = arith.constant 0 : i32
    %c0_i32_0 = arith.constant 0 : i32
    %c0_i32_1 = arith.constant 0 : i32
    return %c0_i32, %c0_i32_0 : i32, i32
  }
  func.func @transform_5(%arg0: i32) -> (i32, i32) {
    %c0_i32 = arith.constant 0 : i32
    %c0_i32_0 = arith.constant 0 : i32
    return %c0_i32, %arg0 : i32, i32
  }
}

</mosaic_0001>

<llo_original>
// kernel: irisnet_forward_feature_major.1
$region0: #{irisnet_forward_feature_major.1}
  #allocation0 [shape = 'u32[]', space=smem, size = 0x4, offset = 0x4, fixed_abs, tag = 'smem constant byte address 0x4 - core index']
  #allocation1 [shape = 'u32[72,128]{1,0:T(1,128)}', space=vmem, size = 0x9000, scoped, tag = 'internal scratch']
  %s0 = inlined_call_operand.vmem [shape: f32[4,1024], index: 0, kind: input, shape index: {}]
  %s1 = inlined_call_operand.vmem [shape: f32[10,4], index: 1, kind: input, shape index: {}]
  %s2 = inlined_call_operand.vmem [shape: f32[10,1], index: 2, kind: input, shape index: {}]
  %s3 = inlined_call_operand.vmem [shape: f32[3,10], index: 3, kind: input, shape index: {}]
  %s4 = inlined_call_operand.vmem [shape: f32[3,1], index: 4, kind: input, shape index: {}]
  %s5 = inlined_call_operand.vmem [shape: f32[3,1024], index: 5, kind: output, shape index: {}]
  %s6 = sld [smem:[#allocation0]]
  $region30: #{irisnet_forward_feature_major.1} parent=0
    _
  %s8 = ssub.s32 1, %s6
  %s9 = scalar_select 0, %s8, %s6
  // Predicated region
  $region2: #{irisnet_forward_feature_major.1} parent=0 // pred_check
    _
  $region3: #{irisnet_forward_feature_major.1} parent=0 // pred_check_branch
    %11 = sbr.rel (0) target = $region5
  $region4: #{irisnet_forward_feature_major.1} parent=0 // pred_region
    _
  $region5: #{irisnet_forward_feature_major.1} parent=0 // pred_fallthru
    _
  // Predicated region
  $region6: #{irisnet_forward_feature_major.1} parent=0 // pred_check
    _
  $region7: #{irisnet_forward_feature_major.1} parent=0 // pred_check_branch
    %13 = sbr.rel (0) target = $region9
  $region8: #{irisnet_forward_feature_major.1} parent=0 // pred_region
    _
  $region9: #{irisnet_forward_feature_major.1} parent=0 // pred_fallthru
    _
  // Predicated region
  $region10: #{irisnet_forward_feature_major.1} parent=0 // pred_check
    _
  $region11: #{irisnet_forward_feature_major.1} parent=0 // pred_check_branch
    %15 = sbr.rel (0) target = $region13
  $region12: #{irisnet_forward_feature_major.1} parent=0 // pred_region
    _
  $region13: #{irisnet_forward_feature_major.1} parent=0 // pred_fallthru
    _
  // Predicated region
  $region14: #{irisnet_forward_feature_major.1} parent=0 // pred_check
    _
  $region15: #{irisnet_forward_feature_major.1} parent=0 // pred_check_branch
    %17 = sbr.rel (0) target = $region17
  $region16: #{irisnet_forward_feature_major.1} parent=0 // pred_region
    _
  $region17: #{irisnet_forward_feature_major.1} parent=0 // pred_fallthru
    _
  // Predicated region
  $region18: #{irisnet_forward_feature_major.1} parent=0 // pred_check
    _
  $region19: #{irisnet_forward_feature_major.1} parent=0 // pred_check_branch
    %19 = sbr.rel (0) target = $region21
  $region20: #{irisnet_forward_feature_major.1} parent=0 // pred_region
    _
  $region21: #{irisnet_forward_feature_major.1} parent=0 // pred_fallthru
    _
  %v20 = vld [vmem:[%s1] sm:$0xff]
  %v21 = vld [vmem:[%s1 + $0x8] sm:$0x3]
  %v22 = vld [vmem:[%s2] sm:$0xff]
  %v23 = vld [vmem:[%s2 + $0x8] sm:$0x3]
  %v24 = vld [vmem:[%s3] sm:$0x7]
  %v25 = vld [vmem:[%s4] sm:$0x7]
  %v26 = vld [vmem:[%s0] sm:$0xff]
  %v27 = vld [vmem:[%s0 + $0x8] sm:$0xff]
  %v28 = vld [vmem:[%s0 + $0x10] sm:$0xff]
  %v29 = vld [vmem:[%s0 + $0x18] sm:$0xff]
  %31 = vset.pattern.permute.xlu0 0
  %32 = vperm.xlu0 %31, %v22
  %v33 = vpop.permute.xlu0 %32
  %36 = vset.pattern.permute.xlu0 0
  %37 = vperm.xlu0 %36, %v23
  %v38 = vpop.permute.xlu0 %37
  %44 = vst [vmem:[#allocation1] ss:$2 sm:$0xff] %v26
  %s45 = scalar_lea.vmem [#allocation1], 16
  %46 = vst [vmem:[%s45] ss:$2 sm:$0xff] %v27
  %s47 = scalar_lea.vmem [#allocation1], 32
  %48 = vst [vmem:[%s47] ss:$2 sm:$0xff] %v28
  %s49 = scalar_lea.vmem [#allocation1], 48
  %50 = vst [vmem:[%s49] ss:$2 sm:$0xff] %v29
  %v51 = vld.sshfl [vmem:[#allocation1] sm:$0xff pattern:$0x75316420]
  %v52 = vld.sshfl [vmem:[#allocation1 + $0x8] sm:$0xff pattern:$0x75316420]
  %v53 = vld.sshfl [vmem:[#allocation1 + $0x10] sm:$0xff pattern:$0x75316420]
  %v54 = vld.sshfl [vmem:[#allocation1 + $0x18] sm:$0xff pattern:$0x75316420]
  %v55 = vld.sshfl [vmem:[#allocation1 + $0x20] sm:$0xff pattern:$0x75316420]
  %v56 = vld.sshfl [vmem:[#allocation1 + $0x28] sm:$0xff pattern:$0x75316420]
  %v57 = vld.sshfl [vmem:[#allocation1 + $0x30] sm:$0xff pattern:$0x75316420]
  %v58 = vld.sshfl [vmem:[#allocation1 + $0x38] sm:$0xff pattern:$0x75316420]
  %vm59 = vcmask 31744
  %v61 = vsel %vm59, %v20, 0
  %v64 = vsel %vm59, %v21, 0
  %vm66 = vcmask 1043456
  %v67 = vsel %vm66, %v51, 0
  %v69 = vsel %vm66, %v52, 0
  %v71 = vsel %vm66, %v53, 0
  %v73 = vsel %vm66, %v54, 0
  %v75 = vsel %vm66, %v55, 0
  %v77 = vsel %vm66, %v56, 0
  %v79 = vsel %vm66, %v57, 0
  %v81 = vsel %vm66, %v58, 0
  %83 = vmatpush.msra.mxu0 0.0
  %84 = vmatpush.msra.mxu0 0.0
  %85 = vmatpush.msra.mxu0 0.0
  %86 = vmatpush.msra.mxu0 0.0
  %87 = vmatpush.msra.mxu0 0.0
  %88 = vmatpush.msra.mxu0 0.0
  %89 = vmatpush.msra.mxu0 0.0
  %90 = vmatpush.msra.mxu0 0.0
  %91 = vmatpush.msra.mxu0 0.0
  %92 = vmatpush.msra.mxu0 0.0
  %93 = vmatpush.msra.mxu0 0.0
  %94 = vmatpush.msra.mxu0 0.0
  %95 = vmatpush.msra.mxu0 0.0
  %96 = vmatpush.msra.mxu0 0.0
  %97 = vmatpush.msra.mxu0 0.0
  %v98 = vand.u32 %v67, 4294901760
  %99 = vmatpush.msra.mxu0 %v98
  %v100 = vand.u32 %v61, 4294901760
  %v101 = vsub.f32 %v61, %v100
  %v102 = vand.u32 %v101, 4294901760
  %v103 = vsub.f32 %v101, %v102
  %v104 = vand.u32 %v103, 4294901760
  %105 = vmatmul.f32.gmra.mxu0 %v104
  %v106 = vpop.f32.mrf.mxu0
  %v107 = vadd.f32 %v33, %v106
  %v108 = vand.u32 %v64, 4294901760
  %v109 = vsub.f32 %v64, %v108
  %v110 = vand.u32 %v109, 4294901760
  %v111 = vsub.f32 %v109, %v110
  %v112 = vand.u32 %v111, 4294901760
  %113 = vmatmul.f32.gmra.mxu0 %v112
  %v114 = vpop.f32.mrf.mxu0
  %v115 = vadd.f32 %v38, %v114
  %116 = vdwg.mxu0
  %117 = vmatpush.msra.mxu0 0.0
  %118 = vmatpush.msra.mxu0 0.0
  %119 = vmatpush.msra.mxu0 0.0
  %120 = vmatpush.msra.mxu0 0.0
  %121 = vmatpush.msra.mxu0 0.0
  %122 = vmatpush.msra.mxu0 0.0
  %123 = vmatpush.msra.mxu0 0.0
  %124 = vmatpush.msra.mxu0 0.0
  %125 = vmatpush.msra.mxu0 0.0
  %126 = vmatpush.msra.mxu0 0.0
  %127 = vmatpush.msra.mxu0 0.0
  %128 = vmatpush.msra.mxu0 0.0
  %129 = vmatpush.msra.mxu0 0.0
  %130 = vmatpush.msra.mxu0 0.0
  %131 = vmatpush.msra.mxu0 0.0
  %v132 = vand.u32 %v67, 4294901760
  %v133 = vsub.f32 %v67, %v132
  %v134 = vand.u32 %v133, 4294901760
  %v135 = vsub.f32 %v133, %v134
  %v136 = vand.u32 %v135, 4294901760
  %137 = vmatpush.msra.mxu0 %v136
  %v138 = vand.u32 %v61, 4294901760
  %139 = vmatmul.f32.gmra.mxu0 %v138
  %v140 = vpop.f32.mrf.mxu0
  %v141 = vadd.f32 %v107, %v140
  %v142 = vand.u32 %v64, 4294901760
  %143 = vmatmul.f32.gmra.mxu0 %v142
  %v144 = vpop.f32.mrf.mxu0
  %v145 = vadd.f32 %v115, %v144
  %146 = vdwg.mxu0
  %147 = vmatpush.msra.mxu0 0.0
  %148 = vmatpush.msra.mxu0 0.0
  %149 = vmatpush.msra.mxu0 0.0
  %150 = vmatpush.msra.mxu0 0.0
  %151 = vmatpush.msra.mxu0 0.0
  %152 = vmatpush.msra.mxu0 0.0
  %153 = vmatpush.msra.mxu0 0.0
  %154 = vmatpush.msra.mxu0 0.0
  %155 = vmatpush.msra.mxu0 0.0
  %156 = vmatpush.msra.mxu0 0.0
  %157 = vmatpush.msra.mxu0 0.0
  %158 = vmatpush.msra.mxu0 0.0
  %159 = vmatpush.msra.mxu0 0.0
  %160 = vmatpush.msra.mxu0 0.0
  %161 = vmatpush.msra.mxu0 0.0
  %v162 = vand.u32 %v67, 4294901760
  %v163 = vsub.f32 %v67, %v162
  %164 = vmatpush.msra.mxu0 %v163
  %v165 = vand.u32 %v61, 4294901760
  %v166 = vsub.f32 %v61, %v165
  %167 = vmatmul.f32.gmra.mxu0 %v166
  %v168 = vpop.f32.mrf.mxu0
  %v169 = vadd.f32 %v141, %v168
  %v170 = vand.u32 %v64, 4294901760
  %v171 = vsub.f32 %v64, %v170
  %172 = vmatmul.f32.gmra.mxu0 %v171
  %v173 = vpop.f32.mrf.mxu0
  %v174 = vadd.f32 %v145, %v173
  %175 = vdwg.mxu0
  %176 = vmatpush.msra.mxu0 0.0
  %177 = vmatpush.msra.mxu0 0.0
  %178 = vmatpush.msra.mxu0 0.0
  %179 = vmatpush.msra.mxu0 0.0
  %180 = vmatpush.msra.mxu0 0.0
  %181 = vmatpush.msra.mxu0 0.0
  %182 = vmatpush.msra.mxu0 0.0
  %183 = vmatpush.msra.mxu0 0.0
  %184 = vmatpush.msra.mxu0 0.0
  %185 = vmatpush.msra.mxu0 0.0
  %186 = vmatpush.msra.mxu0 0.0
  %187 = vmatpush.msra.mxu0 0.0
  %188 = vmatpush.msra.mxu0 0.0
  %189 = vmatpush.msra.mxu0 0.0
  %190 = vmatpush.msra.mxu0 0.0
  %v191 = vand.u32 %v67, 4294901760
  %192 = vmatpush.msra.mxu0 %v191
  %v193 = vand.u32 %v61, 4294901760
  %v194 = vsub.f32 %v61, %v193
  %v195 = vand.u32 %v194, 4294901760
  %196 = vmatmul.f32.gmra.mxu0 %v195
  %v197 = vpop.f32.mrf.mxu0
  %v198 = vadd.f32 %v169, %v197
  %v199 = vand.u32 %v64, 4294901760
  %v200 = vsub.f32 %v64, %v199
  %v201 = vand.u32 %v200, 4294901760
  %202 = vmatmul.f32.gmra.mxu0 %v201
  %v203 = vpop.f32.mrf.mxu0
  %v204 = vadd.f32 %v174, %v203
  %205 = vdwg.mxu0
  %206 = vmatpush.msra.mxu0 0.0
  %207 = vmatpush.msra.mxu0 0.0
  %208 = vmatpush.msra.mxu0 0.0
  %209 = vmatpush.msra.mxu0 0.0
  %210 = vmatpush.msra.mxu0 0.0
  %211 = vmatpush.msra.mxu0 0.0
  %212 = vmatpush.msra.mxu0 0.0
  %213 = vmatpush.msra.mxu0 0.0
  %214 = vmatpush.msra.mxu0 0.0
  %215 = vmatpush.msra.mxu0 0.0
  %216 = vmatpush.msra.mxu0 0.0
  %217 = vmatpush.msra.mxu0 0.0
  %218 = vmatpush.msra.mxu0 0.0
  %219 = vmatpush.msra.mxu0 0.0
  %220 = vmatpush.msra.mxu0 0.0
  %v221 = vand.u32 %v67, 4294901760
  %v222 = vsub.f32 %v67, %v221
  %v223 = vand.u32 %v222, 4294901760
  %224 = vmatpush.msra.mxu0 %v223
  %v225 = vand.u32 %v61, 4294901760
  %226 = vmatmul.f32.gmra.mxu0 %v225
  %v227 = vpop.f32.mrf.mxu0
  %v228 = vadd.f32 %v198, %v227
  %v229 = vand.u32 %v64, 4294901760
  %230 = vmatmul.f32.gmra.mxu0 %v229
  %v231 = vpop.f32.mrf.mxu0
  %v232 = vadd.f32 %v204, %v231
  %233 = vdwg.mxu0
  %234 = vmatpush.msra.mxu0 0.0
  %235 = vmatpush.msra.mxu0 0.0
  %236 = vmatpush.msra.mxu0 0.0
  %237 = vmatpush.msra.mxu0 0.0
  %238 = vmatpush.msra.mxu0 0.0
  %239 = vmatpush.msra.mxu0 0.0
  %240 = vmatpush.msra.mxu0 0.0
  %241 = vmatpush.msra.mxu0 0.0
  %242 = vmatpush.msra.mxu0 0.0
  %243 = vmatpush.msra.mxu0 0.0
  %244 = vmatpush.msra.mxu0 0.0
  %245 = vmatpush.msra.mxu0 0.0
  %246 = vmatpush.msra.mxu0 0.0
  %247 = vmatpush.msra.mxu0 0.0
  %248 = vmatpush.msra.mxu0 0.0
  %v249 = vand.u32 %v67, 4294901760
  %250 = vmatpush.msra.mxu0 %v249
  %v251 = vand.u32 %v61, 4294901760
  %252 = vmatmul.f32.gmra.mxu0 %v251
  %v253 = vpop.f32.mrf.mxu0
  %v254 = vadd.f32 %v228, %v253
  %v255 = vand.u32 %v64, 4294901760
  %256 = vmatmul.f32.gmra.mxu0 %v255
  %v257 = vpop.f32.mrf.mxu0
  %v258 = vadd.f32 %v232, %v257
  %259 = vdwg.mxu0
  %260 = vmatpush.msra.mxu0 0.0
  %261 = vmatpush.msra.mxu0 0.0
  %262 = vmatpush.msra.mxu0 0.0
  %263 = vmatpush.msra.mxu0 0.0
  %264 = vmatpush.msra.mxu0 0.0
  %265 = vmatpush.msra.mxu0 0.0
  %266 = vmatpush.msra.mxu0 0.0
  %267 = vmatpush.msra.mxu0 0.0
  %268 = vmatpush.msra.mxu0 0.0
  %269 = vmatpush.msra.mxu0 0.0
  %270 = vmatpush.msra.mxu0 0.0
  %271 = vmatpush.msra.mxu0 0.0
  %272 = vmatpush.msra.mxu0 0.0
  %273 = vmatpush.msra.mxu0 0.0
  %274 = vmatpush.msra.mxu0 0.0
  %v275 = vand.u32 %v69, 4294901760
  %276 = vmatpush.msra.mxu0 %v275
  %v277 = vand.u32 %v61, 4294901760
  %v278 = vsub.f32 %v61, %v277
  %v279 = vand.u32 %v278, 4294901760
  %v280 = vsub.f32 %v278, %v279
  %v281 = vand.u32 %v280, 4294901760
  %282 = vmatmul.f32.gmra.mxu0 %v281
  %v283 = vpop.f32.mrf.mxu0
  %v284 = vadd.f32 %v33, %v283
  %v285 = vand.u32 %v64, 4294901760
  %v286 = vsub.f32 %v64, %v285
  %v287 = vand.u32 %v286, 4294901760
  %v288 = vsub.f32 %v286, %v287
  %v289 = vand.u32 %v288, 4294901760
  %290 = vmatmul.f32.gmra.mxu0 %v289
  %v291 = vpop.f32.mrf.mxu0
  %v292 = vadd.f32 %v38, %v291
  %293 = vdwg.mxu0
  %294 = vmatpush.msra.mxu0 0.0
  %295 = vmatpush.msra.mxu0 0.0
  %296 = vmatpush.msra.mxu0 0.0
  %297 = vmatpush.msra.mxu0 0.0
  %298 = vmatpush.msra.mxu0 0.0
  %299 = vmatpush.msra.mxu0 0.0
  %300 = vmatpush.msra.mxu0 0.0
  %301 = vmatpush.msra.mxu0 0.0
  %302 = vmatpush.msra.mxu0 0.0
  %303 = vmatpush.msra.mxu0 0.0
  %304 = vmatpush.msra.mxu0 0.0
  %305 = vmatpush.msra.mxu0 0.0
  %306 = vmatpush.msra.mxu0 0.0
  %307 = vmatpush.msra.mxu0 0.0
  %308 = vmatpush.msra.mxu0 0.0
  %v309 = vand.u32 %v69, 4294901760
  %v310 = vsub.f32 %v69, %v309
  %v311 = vand.u32 %v310, 4294901760
  %v312 = vsub.f32 %v310, %v311
  %v313 = vand.u32 %v312, 4294901760
  %314 = vmatpush.msra.mxu0 %v313
  %v315 = vand.u32 %v61, 4294901760
  %316 = vmatmul.f32.gmra.mxu0 %v315
  %v317 = vpop.f32.mrf.mxu0
  %v318 = vadd.f32 %v284, %v317
  %v319 = vand.u32 %v64, 4294901760
  %320 = vmatmul.f32.gmra.mxu0 %v319
  %v321 = vpop.f32.mrf.mxu0
  %v322 = vadd.f32 %v292, %v321
  %323 = vdwg.mxu0
  %324 = vmatpush.msra.mxu0 0.0
  %325 = vmatpush.msra.mxu0 0.0
  %326 = vmatpush.msra.mxu0 0.0
  %327 = vmatpush.msra.mxu0 0.0
  %328 = vmatpush.msra.mxu0 0.0
  %329 = vmatpush.msra.mxu0 0.0
  %330 = vmatpush.msra.mxu0 0.0
  %331 = vmatpush.msra.mxu0 0.0
  %332 = vmatpush.msra.mxu0 0.0
  %333 = vmatpush.msra.mxu0 0.0
  %334 = vmatpush.msra.mxu0 0.0
  %335 = vmatpush.msra.mxu0 0.0
  %336 = vmatpush.msra.mxu0 0.0
  %337 = vmatpush.msra.mxu0 0.0
  %338 = vmatpush.msra.mxu0 0.0
  %v339 = vand.u32 %v69, 4294901760
  %v340 = vsub.f32 %v69, %v339
  %341 = vmatpush.msra.mxu0 %v340
  %v342 = vand.u32 %v61, 4294901760
  %v343 = vsub.f32 %v61, %v342
  %344 = vmatmul.f32.gmra.mxu0 %v343
  %v345 = vpop.f32.mrf.mxu0
  %v346 = vadd.f32 %v318, %v345
  %v347 = vand.u32 %v64, 4294901760
  %v348 = vsub.f32 %v64, %v347
  %349 = vmatmul.f32.gmra.mxu0 %v348
  %v350 = vpop.f32.mrf.mxu0
  %v351 = vadd.f32 %v322, %v350
  %352 = vdwg.mxu0
  %353 = vmatpush.msra.mxu0 0.0
  %354 = vmatpush.msra.mxu0 0.0
  %355 = vmatpush.msra.mxu0 0.0
  %356 = vmatpush.msra.mxu0 0.0
  %357 = vmatpush.msra.mxu0 0.0
  %358 = vmatpush.msra.mxu0 0.0
  %359 = vmatpush.msra.mxu0 0.0
  %360 = vmatpush.msra.mxu0 0.0
  %361 = vmatpush.msra.mxu0 0.0
  %362 = vmatpush.msra.mxu0 0.0
  %363 = vmatpush.msra.mxu0 0.0
  %364 = vmatpush.msra.mxu0 0.0
  %365 = vmatpush.msra.mxu0 0.0
  %366 = vmatpush.msra.mxu0 0.0
  %367 = vmatpush.msra.mxu0 0.0
  %v368 = vand.u32 %v69, 4294901760
  %369 = vmatpush.msra.mxu0 %v368
  %v370 = vand.u32 %v61, 4294901760
  %v371 = vsub.f32 %v61, %v370
  %v372 = vand.u32 %v371, 4294901760
  %373 = vmatmul.f32.gmra.mxu0 %v372
  %v374 = vpop.f32.mrf.mxu0
  %v375 = vadd.f32 %v346, %v374
  %v376 = vand.u32 %v64, 4294901760
  %v377 = vsub.f32 %v64, %v376
  %v378 = vand.u32 %v377, 4294901760
  %379 = vmatmul.f32.gmra.mxu0 %v378
  %v380 = vpop.f32.mrf.mxu0
  %v381 = vadd.f32 %v351, %v380
  %382 = vdwg.mxu0
  %383 = vmatpush.msra.mxu0 0.0
  %384 = vmatpush.msra.mxu0 0.0
  %385 = vmatpush.msra.mxu0 0.0
  %386 = vmatpush.msra.mxu0 0.0
  %387 = vmatpush.msra.mxu0 0.0
  %388 = vmatpush.msra.mxu0 0.0
  %389 = vmatpush.msra.mxu0 0.0
  %390 = vmatpush.msra.mxu0 0.0
  %391 = vmatpush.msra.mxu0 0.0
  %392 = vmatpush.msra.mxu0 0.0
  %393 = vmatpush.msra.mxu0 0.0
  %394 = vmatpush.msra.mxu0 0.0
  %395 = vmatpush.msra.mxu0 0.0
  %396 = vmatpush.msra.mxu0 0.0
  %397 = vmatpush.msra.mxu0 0.0
  %v398 = vand.u32 %v69, 4294901760
  %v399 = vsub.f32 %v69, %v398
  %v400 = vand.u32 %v399, 4294901760
  %401 = vmatpush.msra.mxu0 %v400
  %v402 = vand.u32 %v61, 4294901760
  %403 = vmatmul.f32.gmra.mxu0 %v402
  %v404 = vpop.f32.mrf.mxu0
  %v405 = vadd.f32 %v375, %v404
  %v406 = vand.u32 %v64, 4294901760
  %407 = vmatmul.f32.gmra.mxu0 %v406
  %v408 = vpop.f32.mrf.mxu0
  %v409 = vadd.f32 %v381, %v408
  %410 = vdwg.mxu0
  %411 = vmatpush.msra.mxu0 0.0
  %412 = vmatpush.msra.mxu0 0.0
  %413 = vmatpush.msra.mxu0 0.0
  %414 = vmatpush.msra.mxu0 0.0
  %415 = vmatpush.msra.mxu0 0.0
  %416 = vmatpush.msra.mxu0 0.0
  %417 = vmatpush.msra.mxu0 0.0
  %418 = vmatpush.msra.mxu0 0.0
  %419 = vmatpush.msra.mxu0 0.0
  %420 = vmatpush.msra.mxu0 0.0
  %421 = vmatpush.msra.mxu0 0.0
  %422 = vmatpush.msra.mxu0 0.0
  %423 = vmatpush.msra.mxu0 0.0
  %424 = vmatpush.msra.mxu0 0.0
  %425 = vmatpush.msra.mxu0 0.0
  %v426 = vand.u32 %v69, 4294901760
  %427 = vmatpush.msra.mxu0 %v426
  %v428 = vand.u32 %v61, 4294901760
  %429 = vmatmul.f32.gmra.mxu0 %v428
  %v430 = vpop.f32.mrf.mxu0
  %v431 = vadd.f32 %v405, %v430
  %v432 = vand.u32 %v64, 4294901760
  %433 = vmatmul.f32.gmra.mxu0 %v432
  %v434 = vpop.f32.mrf.mxu0
  %v435 = vadd.f32 %v409, %v434
  %436 = vdwg.mxu0
  %437 = vmatpush.msra.mxu0 0.0
  %438 = vmatpush.msra.mxu0 0.0
  %439 = vmatpush.msra.mxu0 0.0
  %440 = vmatpush.msra.mxu0 0.0
  %441 = vmatpush.msra.mxu0 0.0
  %442 = vmatpush.msra.mxu0 0.0
  %443 = vmatpush.msra.mxu0 0.0
  %444 = vmatpush.msra.mxu0 0.0
  %445 = vmatpush.msra.mxu0 0.0
  %446 = vmatpush.msra.mxu0 0.0
  %447 = vmatpush.msra.mxu0 0.0
  %448 = vmatpush.msra.mxu0 0.0
  %449 = vmatpush.msra.mxu0 0.0
  %450 = vmatpush.msra.mxu0 0.0
  %451 = vmatpush.msra.mxu0 0.0
  %v452 = vand.u32 %v71, 4294901760
  %453 = vmatpush.msra.mxu0 %v452
  %v454 = vand.u32 %v61, 4294901760
  %v455 = vsub.f32 %v61, %v454
  %v456 = vand.u32 %v455, 4294901760
  %v457 = vsub.f32 %v455, %v456
  %v458 = vand.u32 %v457, 4294901760
  %459 = vmatmul.f32.gmra.mxu0 %v458
  %v460 = vpop.f32.mrf.mxu0
  %v461 = vadd.f32 %v33, %v460
  %v462 = vand.u32 %v64, 4294901760
  %v463 = vsub.f32 %v64, %v462
  %v464 = vand.u32 %v463, 4294901760
  %v465 = vsub.f32 %v463, %v464
  %v466 = vand.u32 %v465, 4294901760
  %467 = vmatmul.f32.gmra.mxu0 %v466
  %v468 = vpop.f32.mrf.mxu0
  %v469 = vadd.f32 %v38, %v468
  %470 = vdwg.mxu0
  %471 = vmatpush.msra.mxu0 0.0
  %472 = vmatpush.msra.mxu0 0.0
  %473 = vmatpush.msra.mxu0 0.0
  %474 = vmatpush.msra.mxu0 0.0
  %475 = vmatpush.msra.mxu0 0.0
  %476 = vmatpush.msra.mxu0 0.0
  %477 = vmatpush.msra.mxu0 0.0
  %478 = vmatpush.msra.mxu0 0.0
  %479 = vmatpush.msra.mxu0 0.0
  %480 = vmatpush.msra.mxu0 0.0
  %481 = vmatpush.msra.mxu0 0.0
  %482 = vmatpush.msra.mxu0 0.0
  %483 = vmatpush.msra.mxu0 0.0
  %484 = vmatpush.msra.mxu0 0.0
  %485 = vmatpush.msra.mxu0 0.0
  %v486 = vand.u32 %v71, 4294901760
  %v487 = vsub.f32 %v71, %v486
  %v488 = vand.u32 %v487, 4294901760
  %v489 = vsub.f32 %v487, %v488
  %v490 = vand.u32 %v489, 4294901760
  %491 = vmatpush.msra.mxu0 %v490
  %v492 = vand.u32 %v61, 4294901760
  %493 = vmatmul.f32.gmra.mxu0 %v492
  %v494 = vpop.f32.mrf.mxu0
  %v495 = vadd.f32 %v461, %v494
  %v496 = vand.u32 %v64, 4294901760
  %497 = vmatmul.f32.gmra.mxu0 %v496
  %v498 = vpop.f32.mrf.mxu0
  %v499 = vadd.f32 %v469, %v498
  %500 = vdwg.mxu0
  %501 = vmatpush.msra.mxu0 0.0
  %502 = vmatpush.msra.mxu0 0.0
  %503 = vmatpush.msra.mxu0 0.0
  %504 = vmatpush.msra.mxu0 0.0
  %505 = vmatpush.msra.mxu0 0.0
  %506 = vmatpush.msra.mxu0 0.0
  %507 = vmatpush.msra.mxu0 0.0
  %508 = vmatpush.msra.mxu0 0.0
  %509 = vmatpush.msra.mxu0 0.0
  %510 = vmatpush.msra.mxu0 0.0
  %511 = vmatpush.msra.mxu0 0.0
  %512 = vmatpush.msra.mxu0 0.0
  %513 = vmatpush.msra.mxu0 0.0
  %514 = vmatpush.msra.mxu0 0.0
  %515 = vmatpush.msra.mxu0 0.0
  %v516 = vand.u32 %v71, 4294901760
  %v517 = vsub.f32 %v71, %v516
  %518 = vmatpush.msra.mxu0 %v517
  %v519 = vand.u32 %v61, 4294901760
  %v520 = vsub.f32 %v61, %v519
  %521 = vmatmul.f32.gmra.mxu0 %v520
  %v522 = vpop.f32.mrf.mxu0
  %v523 = vadd.f32 %v495, %v522
  %v524 = vand.u32 %v64, 4294901760
  %v525 = vsub.f32 %v64, %v524
  %526 = vmatmul.f32.gmra.mxu0 %v525
  %v527 = vpop.f32.mrf.mxu0
  %v528 = vadd.f32 %v499, %v527
  %529 = vdwg.mxu0
  %530 = vmatpush.msra.mxu0 0.0
  %531 = vmatpush.msra.mxu0 0.0
  %532 = vmatpush.msra.mxu0 0.0
  %533 = vmatpush.msra.mxu0 0.0
  %534 = vmatpush.msra.mxu0 0.0
  %535 = vmatpush.msra.mxu0 0.0
  %536 = vmatpush.msra.mxu0 0.0
  %537 = vmatpush.msra.mxu0 0.0
  %538 = vmatpush.msra.mxu0 0.0
  %539 = vmatpush.msra.mxu0 0.0
  %540 = vmatpush.msra.mxu0 0.0
  %541 = vmatpush.msra.mxu0 0.0
  %542 = vmatpush.msra.mxu0 0.0
  %543 = vmatpush.msra.mxu0 0.0
  %544 = vmatpush.msra.mxu0 0.0
  %v545 = vand.u32 %v71, 4294901760
  %546 = vmatpush.msra.mxu0 %v545
  %v547 = vand.u32 %v61, 4294901760
  %v548 = vsub.f32 %v61, %v547
  %v549 = vand.u32 %v548, 4294901760
  %550 = vmatmul.f32.gmra.mxu0 %v549
  %v551 = vpop.f32.mrf.mxu0
  %v552 = vadd.f32 %v523, %v551
  %v553 = vand.u32 %v64, 4294901760
  %v554 = vsub.f32 %v64, %v553
  %v555 = vand.u32 %v554, 4294901760
  %556 = vmatmul.f32.gmra.mxu0 %v555
  %v557 = vpop.f32.mrf.mxu0
  %v558 = vadd.f32 %v528, %v557
  %559 = vdwg.mxu0
  %560 = vmatpush.msra.mxu0 0.0
  %561 = vmatpush.msra.mxu0 0.0
  %562 = vmatpush.msra.mxu0 0.0
  %563 = vmatpush.msra.mxu0 0.0
  %564 = vmatpush.msra.mxu0 0.0
  %565 = vmatpush.msra.mxu0 0.0
  %566 = vmatpush.msra.mxu0 0.0
  %567 = vmatpush.msra.mxu0 0.0
  %568 = vmatpush.msra.mxu0 0.0
  %569 = vmatpush.msra.mxu0 0.0
  %570 = vmatpush.msra.mxu0 0.0
  %571 = vmatpush.msra.mxu0 0.0
  %572 = vmatpush.msra.mxu0 0.0
  %573 = vmatpush.msra.mxu0 0.0
  %574 = vmatpush.msra.mxu0 0.0
  %v575 = vand.u32 %v71, 4294901760
  %v576 = vsub.f32 %v71, %v575
  %v577 = vand.u32 %v576, 4294901760
  %578 = vmatpush.msra.mxu0 %v577
  %v579 = vand.u32 %v61, 4294901760
  %580 = vmatmul.f32.gmra.mxu0 %v579
  %v581 = vpop.f32.mrf.mxu0
  %v582 = vadd.f32 %v552, %v581
  %v583 = vand.u32 %v64, 4294901760
  %584 = vmatmul.f32.gmra.mxu0 %v583
  %v585 = vpop.f32.mrf.mxu0
  %v586 = vadd.f32 %v558, %v585
  %587 = vdwg.mxu0
  %588 = vmatpush.msra.mxu0 0.0
  %589 = vmatpush.msra.mxu0 0.0
  %590 = vmatpush.msra.mxu0 0.0
  %591 = vmatpush.msra.mxu0 0.0
  %592 = vmatpush.msra.mxu0 0.0
  %593 = vmatpush.msra.mxu0 0.0
  %594 = vmatpush.msra.mxu0 0.0
  %595 = vmatpush.msra.mxu0 0.0
  %596 = vmatpush.msra.mxu0 0.0
  %597 = vmatpush.msra.mxu0 0.0
  %598 = vmatpush.msra.mxu0 0.0
  %599 = vmatpush.msra.mxu0 0.0
  %600 = vmatpush.msra.mxu0 0.0
  %601 = vmatpush.msra.mxu0 0.0
  %602 = vmatpush.msra.mxu0 0.0
  %v603 = vand.u32 %v71, 4294901760
  %604 = vmatpush.msra.mxu0 %v603
  %v605 = vand.u32 %v61, 4294901760
  %606 = vmatmul.f32.gmra.mxu0 %v605
  %v607 = vpop.f32.mrf.mxu0
  %v608 = vadd.f32 %v582, %v607
  %v609 = vand.u32 %v64, 4294901760
  %610 = vmatmul.f32.gmra.mxu0 %v609
  %v611 = vpop.f32.mrf.mxu0
  %v612 = vadd.f32 %v586, %v611
  %613 = vdwg.mxu0
  %614 = vmatpush.msra.mxu0 0.0
  %615 = vmatpush.msra.mxu0 0.0
  %616 = vmatpush.msra.mxu0 0.0
  %617 = vmatpush.msra.mxu0 0.0
  %618 = vmatpush.msra.mxu0 0.0
  %619 = vmatpush.msra.mxu0 0.0
  %620 = vmatpush.msra.mxu0 0.0
  %621 = vmatpush.msra.mxu0 0.0
  %622 = vmatpush.msra.mxu0 0.0
  %623 = vmatpush.msra.mxu0 0.0
  %624 = vmatpush.msra.mxu0 0.0
  %625 = vmatpush.msra.mxu0 0.0
  %626 = vmatpush.msra.mxu0 0.0
  %627 = vmatpush.msra.mxu0 0.0
  %628 = vmatpush.msra.mxu0 0.0
  %v629 = vand.u32 %v73, 4294901760
  %630 = vmatpush.msra.mxu0 %v629
  %v631 = vand.u32 %v61, 4294901760
  %v632 = vsub.f32 %v61, %v631
  %v633 = vand.u32 %v632, 4294901760
  %v634 = vsub.f32 %v632, %v633
  %v635 = vand.u32 %v634, 4294901760
  %636 = vmatmul.f32.gmra.mxu0 %v635
  %v637 = vpop.f32.mrf.mxu0
  %v638 = vadd.f32 %v33, %v637
  %v639 = vand.u32 %v64, 4294901760
  %v640 = vsub.f32 %v64, %v639
  %v641 = vand.u32 %v640, 4294901760
  %v642 = vsub.f32 %v640, %v641
  %v643 = vand.u32 %v642, 4294901760
  %644 = vmatmul.f32.gmra.mxu0 %v643
  %v645 = vpop.f32.mrf.mxu0
  %v646 = vadd.f32 %v38, %v645
  %647 = vdwg.mxu0
  %648 = vmatpush.msra.mxu0 0.0
  %649 = vmatpush.msra.mxu0 0.0
  %650 = vmatpush.msra.mxu0 0.0
  %651 = vmatpush.msra.mxu0 0.0
  %652 = vmatpush.msra.mxu0 0.0
  %653 = vmatpush.msra.mxu0 0.0
  %654 = vmatpush.msra.mxu0 0.0
  %655 = vmatpush.msra.mxu0 0.0
  %656 = vmatpush.msra.mxu0 0.0
  %657 = vmatpush.msra.mxu0 0.0
  %658 = vmatpush.msra.mxu0 0.0
  %659 = vmatpush.msra.mxu0 0.0
  %660 = vmatpush.msra.mxu0 0.0
  %661 = vmatpush.msra.mxu0 0.0
  %662 = vmatpush.msra.mxu0 0.0
  %v663 = vand.u32 %v73, 4294901760
  %v664 = vsub.f32 %v73, %v663
  %v665 = vand.u32 %v664, 4294901760
  %v666 = vsub.f32 %v664, %v665
  %v667 = vand.u32 %v666, 4294901760
  %668 = vmatpush.msra.mxu0 %v667
  %v669 = vand.u32 %v61, 4294901760
  %670 = vmatmul.f32.gmra.mxu0 %v669
  %v671 = vpop.f32.mrf.mxu0
  %v672 = vadd.f32 %v638, %v671
  %v673 = vand.u32 %v64, 4294901760
  %674 = vmatmul.f32.gmra.mxu0 %v673
  %v675 = vpop.f32.mrf.mxu0
  %v676 = vadd.f32 %v646, %v675
  %677 = vdwg.mxu0
  %678 = vmatpush.msra.mxu0 0.0
  %679 = vmatpush.msra.mxu0 0.0
  %680 = vmatpush.msra.mxu0 0.0
  %681 = vmatpush.msra.mxu0 0.0
  %682 = vmatpush.msra.mxu0 0.0
  %683 = vmatpush.msra.mxu0 0.0
  %684 = vmatpush.msra.mxu0 0.0
  %685 = vmatpush.msra.mxu0 0.0
  %686 = vmatpush.msra.mxu0 0.0
  %687 = vmatpush.msra.mxu0 0.0
  %688 = vmatpush.msra.mxu0 0.0
  %689 = vmatpush.msra.mxu0 0.0
  %690 = vmatpush.msra.mxu0 0.0
  %691 = vmatpush.msra.mxu0 0.0
  %692 = vmatpush.msra.mxu0 0.0
  %v693 = vand.u32 %v73, 4294901760
  %v694 = vsub.f32 %v73, %v693
  %695 = vmatpush.msra.mxu0 %v694
  %v696 = vand.u32 %v61, 4294901760
  %v697 = vsub.f32 %v61, %v696
  %698 = vmatmul.f32.gmra.mxu0 %v697
  %v699 = vpop.f32.mrf.mxu0
  %v700 = vadd.f32 %v672, %v699
  %v701 = vand.u32 %v64, 4294901760
  %v702 = vsub.f32 %v64, %v701
  %703 = vmatmul.f32.gmra.mxu0 %v702
  %v704 = vpop.f32.mrf.mxu0
  %v705 = vadd.f32 %v676, %v704
  %706 = vdwg.mxu0
  %707 = vmatpush.msra.mxu0 0.0
  %708 = vmatpush.msra.mxu0 0.0
  %709 = vmatpush.msra.mxu0 0.0
  %710 = vmatpush.msra.mxu0 0.0
  %711 = vmatpush.msra.mxu0 0.0
  %712 = vmatpush.msra.mxu0 0.0
  %713 = vmatpush.msra.mxu0 0.0
  %714 = vmatpush.msra.mxu0 0.0
  %715 = vmatpush.msra.mxu0 0.0
  %716 = vmatpush.msra.mxu0 0.0
  %717 = vmatpush.msra.mxu0 0.0
  %718 = vmatpush.msra.mxu0 0.0
  %719 = vmatpush.msra.mxu0 0.0
  %720 = vmatpush.msra.mxu0 0.0
  %721 = vmatpush.msra.mxu0 0.0
  %v722 = vand.u32 %v73, 4294901760
  %723 = vmatpush.msra.mxu0 %v722
  %v724 = vand.u32 %v61, 4294901760
  %v725 = vsub.f32 %v61, %v724
  %v726 = vand.u32 %v725, 4294901760
  %727 = vmatmul.f32.gmra.mxu0 %v726
  %v728 = vpop.f32.mrf.mxu0
  %v729 = vadd.f32 %v700, %v728
  %v730 = vand.u32 %v64, 4294901760
  %v731 = vsub.f32 %v64, %v730
  %v732 = vand.u32 %v731, 4294901760
  %733 = vmatmul.f32.gmra.mxu0 %v732
  %v734 = vpop.f32.mrf.mxu0
  %v735 = vadd.f32 %v705, %v734
  %736 = vdwg.mxu0
  %737 = vmatpush.msra.mxu0 0.0
  %738 = vmatpush.msra.mxu0 0.0
  %739 = vmatpush.msra.mxu0 0.0
  %740 = vmatpush.msra.mxu0 0.0
  %741 = vmatpush.msra.mxu0 0.0
  %742 = vmatpush.msra.mxu0 0.0
  %743 = vmatpush.msra.mxu0 0.0
  %744 = vmatpush.msra.mxu0 0.0
  %745 = vmatpush.msra.mxu0 0.0
  %746 = vmatpush.msra.mxu0 0.0
  %747 = vmatpush.msra.mxu0 0.0
  %748 = vmatpush.msra.mxu0 0.0
  %749 = vmatpush.msra.mxu0 0.0
  %750 = vmatpush.msra.mxu0 0.0
  %751 = vmatpush.msra.mxu0 0.0
  %v752 = vand.u32 %v73, 4294901760
  %v753 = vsub.f32 %v73, %v752
  %v754 = vand.u32 %v753, 4294901760
  %755 = vmatpush.msra.mxu0 %v754
  %v756 = vand.u32 %v61, 4294901760
  %757 = vmatmul.f32.gmra.mxu0 %v756
  %v758 = vpop.f32.mrf.mxu0
  %v759 = vadd.f32 %v729, %v758
  %v760 = vand.u32 %v64, 4294901760
  %761 = vmatmul.f32.gmra.mxu0 %v760
  %v762 = vpop.f32.mrf.mxu0
  %v763 = vadd.f32 %v735, %v762
  %764 = vdwg.mxu0
  %765 = vmatpush.msra.mxu0 0.0
  %766 = vmatpush.msra.mxu0 0.0
  %767 = vmatpush.msra.mxu0 0.0
  %768 = vmatpush.msra.mxu0 0.0
  %769 = vmatpush.msra.mxu0 0.0
  %770 = vmatpush.msra.mxu0 0.0
  %771 = vmatpush.msra.mxu0 0.0
  %772 = vmatpush.msra.mxu0 0.0
  %773 = vmatpush.msra.mxu0 0.0
  %774 = vmatpush.msra.mxu0 0.0
  %775 = vmatpush.msra.mxu0 0.0
  %776 = vmatpush.msra.mxu0 0.0
  %777 = vmatpush.msra.mxu0 0.0
  %778 = vmatpush.msra.mxu0 0.0
  %779 = vmatpush.msra.mxu0 0.0
  %v780 = vand.u32 %v73, 4294901760
  %781 = vmatpush.msra.mxu0 %v780
  %v782 = vand.u32 %v61, 4294901760
  %783 = vmatmul.f32.gmra.mxu0 %v782
  %v784 = vpop.f32.mrf.mxu0
  %v785 = vadd.f32 %v759, %v784
  %v786 = vand.u32 %v64, 4294901760
  %787 = vmatmul.f32.gmra.mxu0 %v786
  %v788 = vpop.f32.mrf.mxu0
  %v789 = vadd.f32 %v763, %v788
  %790 = vdwg.mxu0
  %791 = vmatpush.msra.mxu0 0.0
  %792 = vmatpush.msra.mxu0 0.0
  %793 = vmatpush.msra.mxu0 0.0
  %794 = vmatpush.msra.mxu0 0.0
  %795 = vmatpush.msra.mxu0 0.0
  %796 = vmatpush.msra.mxu0 0.0
  %797 = vmatpush.msra.mxu0 0.0
  %798 = vmatpush.msra.mxu0 0.0
  %799 = vmatpush.msra.mxu0 0.0
  %800 = vmatpush.msra.mxu0 0.0
  %801 = vmatpush.msra.mxu0 0.0
  %802 = vmatpush.msra.mxu0 0.0
  %803 = vmatpush.msra.mxu0 0.0
  %804 = vmatpush.msra.mxu0 0.0
  %805 = vmatpush.msra.mxu0 0.0
  %v806 = vand.u32 %v75, 4294901760
  %807 = vmatpush.msra.mxu0 %v806
  %v808 = vand.u32 %v61, 4294901760
  %v809 = vsub.f32 %v61, %v808
  %v810 = vand.u32 %v809, 4294901760
  %v811 = vsub.f32 %v809, %v810
  %v812 = vand.u32 %v811, 4294901760
  %813 = vmatmul.f32.gmra.mxu0 %v812
  %v814 = vpop.f32.mrf.mxu0
  %v815 = vadd.f32 %v33, %v814
  %v816 = vand.u32 %v64, 4294901760
  %v817 = vsub.f32 %v64, %v816
  %v818 = vand.u32 %v817, 4294901760
  %v819 = vsub.f32 %v817, %v818
  %v820 = vand.u32 %v819, 4294901760
  %821 = vmatmul.f32.gmra.mxu0 %v820
  %v822 = vpop.f32.mrf.mxu0
  %v823 = vadd.f32 %v38, %v822
  %824 = vdwg.mxu0
  %825 = vmatpush.msra.mxu0 0.0
  %826 = vmatpush.msra.mxu0 0.0
  %827 = vmatpush.msra.mxu0 0.0
  %828 = vmatpush.msra.mxu0 0.0
  %829 = vmatpush.msra.mxu0 0.0
  %830 = vmatpush.msra.mxu0 0.0
  %831 = vmatpush.msra.mxu0 0.0
  %832 = vmatpush.msra.mxu0 0.0
  %833 = vmatpush.msra.mxu0 0.0
  %834 = vmatpush.msra.mxu0 0.0
  %835 = vmatpush.msra.mxu0 0.0
  %836 = vmatpush.msra.mxu0 0.0
  %837 = vmatpush.msra.mxu0 0.0
  %838 = vmatpush.msra.mxu0 0.0
  %839 = vmatpush.msra.mxu0 0.0
  %v840 = vand.u32 %v75, 4294901760
  %v841 = vsub.f32 %v75, %v840
  %v842 = vand.u32 %v841, 4294901760
  %v843 = vsub.f32 %v841, %v842
  %v844 = vand.u32 %v843, 4294901760
  %845 = vmatpush.msra.mxu0 %v844
  %v846 = vand.u32 %v61, 4294901760
  %847 = vmatmul.f32.gmra.mxu0 %v846
  %v848 = vpop.f32.mrf.mxu0
  %v849 = vadd.f32 %v815, %v848
  %v850 = vand.u32 %v64, 4294901760
  %851 = vmatmul.f32.gmra.mxu0 %v850
  %v852 = vpop.f32.mrf.mxu0
  %v853 = vadd.f32 %v823, %v852
  %854 = vdwg.mxu0
  %855 = vmatpush.msra.mxu0 0.0
  %856 = vmatpush.msra.mxu0 0.0
  %857 = vmatpush.msra.mxu0 0.0
  %858 = vmatpush.msra.mxu0 0.0
  %859 = vmatpush.msra.mxu0 0.0
  %860 = vmatpush.msra.mxu0 0.0
  %861 = vmatpush.msra.mxu0 0.0
  %862 = vmatpush.msra.mxu0 0.0
  %863 = vmatpush.msra.mxu0 0.0
  %864 = vmatpush.msra.mxu0 0.0
  %865 = vmatpush.msra.mxu0 0.0
  %866 = vmatpush.msra.mxu0 0.0
  %867 = vmatpush.msra.mxu0 0.0
  %868 = vmatpush.msra.mxu0 0.0
  %869 = vmatpush.msra.mxu0 0.0
  %v870 = vand.u32 %v75, 4294901760
  %v871 = vsub.f32 %v75, %v870
  %872 = vmatpush.msra.mxu0 %v871
  %v873 = vand.u32 %v61, 4294901760
  %v874 = vsub.f32 %v61, %v873
  %875 = vmatmul.f32.gmra.mxu0 %v874
  %v876 = vpop.f32.mrf.mxu0
  %v877 = vadd.f32 %v849, %v876
  %v878 = vand.u32 %v64, 4294901760
  %v879 = vsub.f32 %v64, %v878
  %880 = vmatmul.f32.gmra.mxu0 %v879
  %v881 = vpop.f32.mrf.mxu0
  %v882 = vadd.f32 %v853, %v881
  %883 = vdwg.mxu0
  %884 = vmatpush.msra.mxu0 0.0
  %885 = vmatpush.msra.mxu0 0.0
  %886 = vmatpush.msra.mxu0 0.0
  %887 = vmatpush.msra.mxu0 0.0
  %888 = vmatpush.msra.mxu0 0.0
  %889 = vmatpush.msra.mxu0 0.0
  %890 = vmatpush.msra.mxu0 0.0
  %891 = vmatpush.msra.mxu0 0.0
  %892 = vmatpush.msra.mxu0 0.0
  %893 = vmatpush.msra.mxu0 0.0
  %894 = vmatpush.msra.mxu0 0.0
  %895 = vmatpush.msra.mxu0 0.0
  %896 = vmatpush.msra.mxu0 0.0
  %897 = vmatpush.msra.mxu0 0.0
  %898 = vmatpush.msra.mxu0 0.0
  %v899 = vand.u32 %v75, 4294901760
  %900 = vmatpush.msra.mxu0 %v899
  %v901 = vand.u32 %v61, 4294901760
  %v902 = vsub.f32 %v61, %v901
  %v903 = vand.u32 %v902, 4294901760
  %904 = vmatmul.f32.gmra.mxu0 %v903
  %v905 = vpop.f32.mrf.mxu0
  %v906 = vadd.f32 %v877, %v905
  %v907 = vand.u32 %v64, 4294901760
  %v908 = vsub.f32 %v64, %v907
  %v909 = vand.u32 %v908, 4294901760
  %910 = vmatmul.f32.gmra.mxu0 %v909
  %v911 = vpop.f32.mrf.mxu0
  %v912 = vadd.f32 %v882, %v911
  %913 = vdwg.mxu0
  %914 = vmatpush.msra.mxu0 0.0
  %915 = vmatpush.msra.mxu0 0.0
  %916 = vmatpush.msra.mxu0 0.0
  %917 = vmatpush.msra.mxu0 0.0
  %918 = vmatpush.msra.mxu0 0.0
  %919 = vmatpush.msra.mxu0 0.0
  %920 = vmatpush.msra.mxu0 0.0
  %921 = vmatpush.msra.mxu0 0.0
  %922 = vmatpush.msra.mxu0 0.0
  %923 = vmatpush.msra.mxu0 0.0
  %924 = vmatpush.msra.mxu0 0.0
  %925 = vmatpush.msra.mxu0 0.0
  %926 = vmatpush.msra.mxu0 0.0
  %927 = vmatpush.msra.mxu0 0.0
  %928 = vmatpush.msra.mxu0 0.0
  %v929 = vand.u32 %v75, 4294901760
  %v930 = vsub.f32 %v75, %v929
  %v931 = vand.u32 %v930, 4294901760
  %932 = vmatpush.msra.mxu0 %v931
  %v933 = vand.u32 %v61, 4294901760
  %934 = vmatmul.f32.gmra.mxu0 %v933
  %v935 = vpop.f32.mrf.mxu0
  %v936 = vadd.f32 %v906, %v935
  %v937 = vand.u32 %v64, 4294901760
  %938 = vmatmul.f32.gmra.mxu0 %v937
  %v939 = vpop.f32.mrf.mxu0
  %v940 = vadd.f32 %v912, %v939
  %941 = vdwg.mxu0
  %942 = vmatpush.msra.mxu0 0.0
  %943 = vmatpush.msra.mxu0 0.0
  %944 = vmatpush.msra.mxu0 0.0
  %945 = vmatpush.msra.mxu0 0.0
  %946 = vmatpush.msra.mxu0 0.0
  %947 = vmatpush.msra.mxu0 0.0
  %948 = vmatpush.msra.mxu0 0.0
  %949 = vmatpush.msra.mxu0 0.0
  %950 = vmatpush.msra.mxu0 0.0
  %951 = vmatpush.msra.mxu0 0.0
  %952 = vmatpush.msra.mxu0 0.0
  %953 = vmatpush.msra.mxu0 0.0
  %954 = vmatpush.msra.mxu0 0.0
  %955 = vmatpush.msra.mxu0 0.0
  %956 = vmatpush.msra.mxu0 0.0
  %v957 = vand.u32 %v75, 4294901760
  %958 = vmatpush.msra.mxu0 %v957
  %v959 = vand.u32 %v61, 4294901760
  %960 = vmatmul.f32.gmra.mxu0 %v959
  %v961 = vpop.f32.mrf.mxu0
  %v962 = vadd.f32 %v936, %v961
  %v963 = vand.u32 %v64, 4294901760
  %964 = vmatmul.f32.gmra.mxu0 %v963
  %v965 = vpop.f32.mrf.mxu0
  %v966 = vadd.f32 %v940, %v965
  %967 = vdwg.mxu0
  %968 = vmatpush.msra.mxu0 0.0
  %969 = vmatpush.msra.mxu0 0.0
  %970 = vmatpush.msra.mxu0 0.0
  %971 = vmatpush.msra.mxu0 0.0
  %972 = vmatpush.msra.mxu0 0.0
  %973 = vmatpush.msra.mxu0 0.0
  %974 = vmatpush.msra.mxu0 0.0
  %975 = vmatpush.msra.mxu0 0.0
  %976 = vmatpush.msra.mxu0 0.0
  %977 = vmatpush.msra.mxu0 0.0
  %978 = vmatpush.msra.mxu0 0.0
  %979 = vmatpush.msra.mxu0 0.0
  %980 = vmatpush.msra.mxu0 0.0
  %981 = vmatpush.msra.mxu0 0.0
  %982 = vmatpush.msra.mxu0 0.0
  %v983 = vand.u32 %v77, 4294901760
  %984 = vmatpush.msra.mxu0 %v983
  %v985 = vand.u32 %v61, 4294901760
  %v986 = vsub.f32 %v61, %v985
  %v987 = vand.u32 %v986, 4294901760
  %v988 = vsub.f32 %v986, %v987
  %v989 = vand.u32 %v988, 4294901760
  %990 = vmatmul.f32.gmra.mxu0 %v989
  %v991 = vpop.f32.mrf.mxu0
  %v992 = vadd.f32 %v33, %v991
  %v993 = vand.u32 %v64, 4294901760
  %v994 = vsub.f32 %v64, %v993
  %v995 = vand.u32 %v994, 4294901760
  %v996 = vsub.f32 %v994, %v995
  %v997 = vand.u32 %v996, 4294901760
  %998 = vmatmul.f32.gmra.mxu0 %v997
  %v999 = vpop.f32.mrf.mxu0
  %v1000 = vadd.f32 %v38, %v999
  %1001 = vdwg.mxu0
  %1002 = vmatpush.msra.mxu0 0.0
  %1003 = vmatpush.msra.mxu0 0.0
  %1004 = vmatpush.msra.mxu0 0.0
  %1005 = vmatpush.msra.mxu0 0.0
  %1006 = vmatpush.msra.mxu0 0.0
  %1007 = vmatpush.msra.mxu0 0.0
  %1008 = vmatpush.msra.mxu0 0.0
  %1009 = vmatpush.msra.mxu0 0.0
  %1010 = vmatpush.msra.mxu0 0.0
  %1011 = vmatpush.msra.mxu0 0.0
  %1012 = vmatpush.msra.mxu0 0.0
  %1013 = vmatpush.msra.mxu0 0.0
  %1014 = vmatpush.msra.mxu0 0.0
  %1015 = vmatpush.msra.mxu0 0.0
  %1016 = vmatpush.msra.mxu0 0.0
  %v1017 = vand.u32 %v77, 4294901760
  %v1018 = vsub.f32 %v77, %v1017
  %v1019 = vand.u32 %v1018, 4294901760
  %v1020 = vsub.f32 %v1018, %v1019
  %v1021 = vand.u32 %v1020, 4294901760
  %1022 = vmatpush.msra.mxu0 %v1021
  %v1023 = vand.u32 %v61, 4294901760
  %1024 = vmatmul.f32.gmra.mxu0 %v1023
  %v1025 = vpop.f32.mrf.mxu0
  %v1026 = vadd.f32 %v992, %v1025
  %v1027 = vand.u32 %v64, 4294901760
  %1028 = vmatmul.f32.gmra.mxu0 %v1027
  %v1029 = vpop.f32.mrf.mxu0
  %v1030 = vadd.f32 %v1000, %v1029
  %1031 = vdwg.mxu0
  %1032 = vmatpush.msra.mxu0 0.0
  %1033 = vmatpush.msra.mxu0 0.0
  %1034 = vmatpush.msra.mxu0 0.0
  %1035 = vmatpush.msra.mxu0 0.0
  %1036 = vmatpush.msra.mxu0 0.0
  %1037 = vmatpush.msra.mxu0 0.0
  %1038 = vmatpush.msra.mxu0 0.0
  %1039 = vmatpush.msra.mxu0 0.0
  %1040 = vmatpush.msra.mxu0 0.0
  %1041 = vmatpush.msra.mxu0 0.0
  %1042 = vmatpush.msra.mxu0 0.0
  %1043 = vmatpush.msra.mxu0 0.0
  %1044 = vmatpush.msra.mxu0 0.0
  %1045 = vmatpush.msra.mxu0 0.0
  %1046 = vmatpush.msra.mxu0 0.0
  %v1047 = vand.u32 %v77, 4294901760
  %v1048 = vsub.f32 %v77, %v1047
  %1049 = vmatpush.msra.mxu0 %v1048
  %v1050 = vand.u32 %v61, 4294901760
  %v1051 = vsub.f32 %v61, %v1050
  %1052 = vmatmul.f32.gmra.mxu0 %v1051
  %v1053 = vpop.f32.mrf.mxu0
  %v1054 = vadd.f32 %v1026, %v1053
  %v1055 = vand.u32 %v64, 4294901760
  %v1056 = vsub.f32 %v64, %v1055
  %1057 = vmatmul.f32.gmra.mxu0 %v1056
  %v1058 = vpop.f32.mrf.mxu0
  %v1059 = vadd.f32 %v1030, %v1058
  %1060 = vdwg.mxu0
  %1061 = vmatpush.msra.mxu0 0.0
  %1062 = vmatpush.msra.mxu0 0.0
  %1063 = vmatpush.msra.mxu0 0.0
  %1064 = vmatpush.msra.mxu0 0.0
  %1065 = vmatpush.msra.mxu0 0.0
  %1066 = vmatpush.msra.mxu0 0.0
  %1067 = vmatpush.msra.mxu0 0.0
  %1068 = vmatpush.msra.mxu0 0.0
  %1069 = vmatpush.msra.mxu0 0.0
  %1070 = vmatpush.msra.mxu0 0.0
  %1071 = vmatpush.msra.mxu0 0.0
  %1072 = vmatpush.msra.mxu0 0.0
  %1073 = vmatpush.msra.mxu0 0.0
  %1074 = vmatpush.msra.mxu0 0.0
  %1075 = vmatpush.msra.mxu0 0.0
  %v1076 = vand.u32 %v77, 4294901760
  %1077 = vmatpush.msra.mxu0 %v1076
  %v1078 = vand.u32 %v61, 4294901760
  %v1079 = vsub.f32 %v61, %v1078
  %v1080 = vand.u32 %v1079, 4294901760
  %1081 = vmatmul.f32.gmra.mxu0 %v1080
  %v1082 = vpop.f32.mrf.mxu0
  %v1083 = vadd.f32 %v1054, %v1082
  %v1084 = vand.u32 %v64, 4294901760
  %v1085 = vsub.f32 %v64, %v1084
  %v1086 = vand.u32 %v1085, 4294901760
  %1087 = vmatmul.f32.gmra.mxu0 %v1086
  %v1088 = vpop.f32.mrf.mxu0
  %v1089 = vadd.f32 %v1059, %v1088
  %1090 = vdwg.mxu0
  %1091 = vmatpush.msra.mxu0 0.0
  %1092 = vmatpush.msra.mxu0 0.0
  %1093 = vmatpush.msra.mxu0 0.0
  %1094 = vmatpush.msra.mxu0 0.0
  %1095 = vmatpush.msra.mxu0 0.0
  %1096 = vmatpush.msra.mxu0 0.0
  %1097 = vmatpush.msra.mxu0 0.0
  %1098 = vmatpush.msra.mxu0 0.0
  %1099 = vmatpush.msra.mxu0 0.0
  %1100 = vmatpush.msra.mxu0 0.0
  %1101 = vmatpush.msra.mxu0 0.0
  %1102 = vmatpush.msra.mxu0 0.0
  %1103 = vmatpush.msra.mxu0 0.0
  %1104 = vmatpush.msra.mxu0 0.0
  %1105 = vmatpush.msra.mxu0 0.0
  %v1106 = vand.u32 %v77, 4294901760
  %v1107 = vsub.f32 %v77, %v1106
  %v1108 = vand.u32 %v1107, 4294901760
  %1109 = vmatpush.msra.mxu0 %v1108
  %v1110 = vand.u32 %v61, 4294901760
  %1111 = vmatmul.f32.gmra.mxu0 %v1110
  %v1112 = vpop.f32.mrf.mxu0
  %v1113 = vadd.f32 %v1083, %v1112
  %v1114 = vand.u32 %v64, 4294901760
  %1115 = vmatmul.f32.gmra.mxu0 %v1114
  %v1116 = vpop.f32.mrf.mxu0
  %v1117 = vadd.f32 %v1089, %v1116
  %1118 = vdwg.mxu0
  %1119 = vmatpush.msra.mxu0 0.0
  %1120 = vmatpush.msra.mxu0 0.0
  %1121 = vmatpush.msra.mxu0 0.0
  %1122 = vmatpush.msra.mxu0 0.0
  %1123 = vmatpush.msra.mxu0 0.0
  %1124 = vmatpush.msra.mxu0 0.0
  %1125 = vmatpush.msra.mxu0 0.0
  %1126 = vmatpush.msra.mxu0 0.0
  %1127 = vmatpush.msra.mxu0 0.0
  %1128 = vmatpush.msra.mxu0 0.0
  %1129 = vmatpush.msra.mxu0 0.0
  %1130 = vmatpush.msra.mxu0 0.0
  %1131 = vmatpush.msra.mxu0 0.0
  %1132 = vmatpush.msra.mxu0 0.0
  %1133 = vmatpush.msra.mxu0 0.0
  %v1134 = vand.u32 %v77, 4294901760
  %1135 = vmatpush.msra.mxu0 %v1134
  %v1136 = vand.u32 %v61, 4294901760
  %1137 = vmatmul.f32.gmra.mxu0 %v1136
  %v1138 = vpop.f32.mrf.mxu0
  %v1139 = vadd.f32 %v1113, %v1138
  %v1140 = vand.u32 %v64, 4294901760
  %1141 = vmatmul.f32.gmra.mxu0 %v1140
  %v1142 = vpop.f32.mrf.mxu0
  %v1143 = vadd.f32 %v1117, %v1142
  %1144 = vdwg.mxu0
  %1145 = vmatpush.msra.mxu0 0.0
  %1146 = vmatpush.msra.mxu0 0.0
  %1147 = vmatpush.msra.mxu0 0.0
  %1148 = vmatpush.msra.mxu0 0.0
  %1149 = vmatpush.msra.mxu0 0.0
  %1150 = vmatpush.msra.mxu0 0.0
  %1151 = vmatpush.msra.mxu0 0.0
  %1152 = vmatpush.msra.mxu0 0.0
  %1153 = vmatpush.msra.mxu0 0.0
  %1154 = vmatpush.msra.mxu0 0.0
  %1155 = vmatpush.msra.mxu0 0.0
  %1156 = vmatpush.msra.mxu0 0.0
  %1157 = vmatpush.msra.mxu0 0.0
  %1158 = vmatpush.msra.mxu0 0.0
  %1159 = vmatpush.msra.mxu0 0.0
  %v1160 = vand.u32 %v79, 4294901760
  %1161 = vmatpush.msra.mxu0 %v1160
  %v1162 = vand.u32 %v61, 4294901760
  %v1163 = vsub.f32 %v61, %v1162
  %v1164 = vand.u32 %v1163, 4294901760
  %v1165 = vsub.f32 %v1163, %v1164
  %v1166 = vand.u32 %v1165, 4294901760
  %1167 = vmatmul.f32.gmra.mxu0 %v1166
  %v1168 = vpop.f32.mrf.mxu0
  %v1169 = vadd.f32 %v33, %v1168
  %v1170 = vand.u32 %v64, 4294901760
  %v1171 = vsub.f32 %v64, %v1170
  %v1172 = vand.u32 %v1171, 4294901760
  %v1173 = vsub.f32 %v1171, %v1172
  %v1174 = vand.u32 %v1173, 4294901760
  %1175 = vmatmul.f32.gmra.mxu0 %v1174
  %v1176 = vpop.f32.mrf.mxu0
  %v1177 = vadd.f32 %v38, %v1176
  %1178 = vdwg.mxu0
  %1179 = vmatpush.msra.mxu0 0.0
  %1180 = vmatpush.msra.mxu0 0.0
  %1181 = vmatpush.msra.mxu0 0.0
  %1182 = vmatpush.msra.mxu0 0.0
  %1183 = vmatpush.msra.mxu0 0.0
  %1184 = vmatpush.msra.mxu0 0.0
  %1185 = vmatpush.msra.mxu0 0.0
  %1186 = vmatpush.msra.mxu0 0.0
  %1187 = vmatpush.msra.mxu0 0.0
  %1188 = vmatpush.msra.mxu0 0.0
  %1189 = vmatpush.msra.mxu0 0.0
  %1190 = vmatpush.msra.mxu0 0.0
  %1191 = vmatpush.msra.mxu0 0.0
  %1192 = vmatpush.msra.mxu0 0.0
  %1193 = vmatpush.msra.mxu0 0.0
  %v1194 = vand.u32 %v79, 4294901760
  %v1195 = vsub.f32 %v79, %v1194
  %v1196 = vand.u32 %v1195, 4294901760
  %v1197 = vsub.f32 %v1195, %v1196
  %v1198 = vand.u32 %v1197, 4294901760
  %1199 = vmatpush.msra.mxu0 %v1198
  %v1200 = vand.u32 %v61, 4294901760
  %1201 = vmatmul.f32.gmra.mxu0 %v1200
  %v1202 = vpop.f32.mrf.mxu0
  %v1203 = vadd.f32 %v1169, %v1202
  %v1204 = vand.u32 %v64, 4294901760
  %1205 = vmatmul.f32.gmra.mxu0 %v1204
  %v1206 = vpop.f32.mrf.mxu0
  %v1207 = vadd.f32 %v1177, %v1206
  %1208 = vdwg.mxu0
  %1209 = vmatpush.msra.mxu0 0.0
  %1210 = vmatpush.msra.mxu0 0.0
  %1211 = vmatpush.msra.mxu0 0.0
  %1212 = vmatpush.msra.mxu0 0.0
  %1213 = vmatpush.msra.mxu0 0.0
  %1214 = vmatpush.msra.mxu0 0.0
  %1215 = vmatpush.msra.mxu0 0.0
  %1216 = vmatpush.msra.mxu0 0.0
  %1217 = vmatpush.msra.mxu0 0.0
  %1218 = vmatpush.msra.mxu0 0.0
  %1219 = vmatpush.msra.mxu0 0.0
  %1220 = vmatpush.msra.mxu0 0.0
  %1221 = vmatpush.msra.mxu0 0.0
  %1222 = vmatpush.msra.mxu0 0.0
  %1223 = vmatpush.msra.mxu0 0.0
  %v1224 = vand.u32 %v79, 4294901760
  %v1225 = vsub.f32 %v79, %v1224
  %1226 = vmatpush.msra.mxu0 %v1225
  %v1227 = vand.u32 %v61, 4294901760
  %v1228 = vsub.f32 %v61, %v1227
  %1229 = vmatmul.f32.gmra.mxu0 %v1228
  %v1230 = vpop.f32.mrf.mxu0
  %v1231 = vadd.f32 %v1203, %v1230
  %v1232 = vand.u32 %v64, 4294901760
  %v1233 = vsub.f32 %v64, %v1232
  %1234 = vmatmul.f32.gmra.mxu0 %v1233
  %v1235 = vpop.f32.mrf.mxu0
  %v1236 = vadd.f32 %v1207, %v1235
  %1237 = vdwg.mxu0
  %1238 = vmatpush.msra.mxu0 0.0
  %1239 = vmatpush.msra.mxu0 0.0
  %1240 = vmatpush.msra.mxu0 0.0
  %1241 = vmatpush.msra.mxu0 0.0
  %1242 = vmatpush.msra.mxu0 0.0
  %1243 = vmatpush.msra.mxu0 0.0
  %1244 = vmatpush.msra.mxu0 0.0
  %1245 = vmatpush.msra.mxu0 0.0
  %1246 = vmatpush.msra.mxu0 0.0
  %1247 = vmatpush.msra.mxu0 0.0
  %1248 = vmatpush.msra.mxu0 0.0
  %1249 = vmatpush.msra.mxu0 0.0
  %1250 = vmatpush.msra.mxu0 0.0
  %1251 = vmatpush.msra.mxu0 0.0
  %1252 = vmatpush.msra.mxu0 0.0
  %v1253 = vand.u32 %v79, 4294901760
  %1254 = vmatpush.msra.mxu0 %v1253
  %v1255 = vand.u32 %v61, 4294901760
  %v1256 = vsub.f32 %v61, %v1255
  %v1257 = vand.u32 %v1256, 4294901760
  %1258 = vmatmul.f32.gmra.mxu0 %v1257
  %v1259 = vpop.f32.mrf.mxu0
  %v1260 = vadd.f32 %v1231, %v1259
  %v1261 = vand.u32 %v64, 4294901760
  %v1262 = vsub.f32 %v64, %v1261
  %v1263 = vand.u32 %v1262, 4294901760
  %1264 = vmatmul.f32.gmra.mxu0 %v1263
  %v1265 = vpop.f32.mrf.mxu0
  %v1266 = vadd.f32 %v1236, %v1265
  %1267 = vdwg.mxu0
  %1268 = vmatpush.msra.mxu0 0.0
  %1269 = vmatpush.msra.mxu0 0.0
  %1270 = vmatpush.msra.mxu0 0.0
  %1271 = vmatpush.msra.mxu0 0.0
  %1272 = vmatpush.msra.mxu0 0.0
  %1273 = vmatpush.msra.mxu0 0.0
  %1274 = vmatpush.msra.mxu0 0.0
  %1275 = vmatpush.msra.mxu0 0.0
  %1276 = vmatpush.msra.mxu0 0.0
  %1277 = vmatpush.msra.mxu0 0.0
  %1278 = vmatpush.msra.mxu0 0.0
  %1279 = vmatpush.msra.mxu0 0.0
  %1280 = vmatpush.msra.mxu0 0.0
  %1281 = vmatpush.msra.mxu0 0.0
  %1282 = vmatpush.msra.mxu0 0.0
  %v1283 = vand.u32 %v79, 4294901760
  %v1284 = vsub.f32 %v79, %v1283
  %v1285 = vand.u32 %v1284, 4294901760
  %1286 = vmatpush.msra.mxu0 %v1285
  %v1287 = vand.u32 %v61, 4294901760
  %1288 = vmatmul.f32.gmra.mxu0 %v1287
  %v1289 = vpop.f32.mrf.mxu0
  %v1290 = vadd.f32 %v1260, %v1289
  %v1291 = vand.u32 %v64, 4294901760
  %1292 = vmatmul.f32.gmra.mxu0 %v1291
  %v1293 = vpop.f32.mrf.mxu0
  %v1294 = vadd.f32 %v1266, %v1293
  %1295 = vdwg.mxu0
  %1296 = vmatpush.msra.mxu0 0.0
  %1297 = vmatpush.msra.mxu0 0.0
  %1298 = vmatpush.msra.mxu0 0.0
  %1299 = vmatpush.msra.mxu0 0.0
  %1300 = vmatpush.msra.mxu0 0.0
  %1301 = vmatpush.msra.mxu0 0.0
  %1302 = vmatpush.msra.mxu0 0.0
  %1303 = vmatpush.msra.mxu0 0.0
  %1304 = vmatpush.msra.mxu0 0.0
  %1305 = vmatpush.msra.mxu0 0.0
  %1306 = vmatpush.msra.mxu0 0.0
  %1307 = vmatpush.msra.mxu0 0.0
  %1308 = vmatpush.msra.mxu0 0.0
  %1309 = vmatpush.msra.mxu0 0.0
  %1310 = vmatpush.msra.mxu0 0.0
  %v1311 = vand.u32 %v79, 4294901760
  %1312 = vmatpush.msra.mxu0 %v1311
  %v1313 = vand.u32 %v61, 4294901760
  %1314 = vmatmul.f32.gmra.mxu0 %v1313
  %v1315 = vpop.f32.mrf.mxu0
  %v1316 = vadd.f32 %v1290, %v1315
  %v1317 = vand.u32 %v64, 4294901760
  %1318 = vmatmul.f32.gmra.mxu0 %v1317
  %v1319 = vpop.f32.mrf.mxu0
  %v1320 = vadd.f32 %v1294, %v1319
  %1321 = vdwg.mxu0
  %1322 = vmatpush.msra.mxu0 0.0
  %1323 = vmatpush.msra.mxu0 0.0
  %1324 = vmatpush.msra.mxu0 0.0
  %1325 = vmatpush.msra.mxu0 0.0
  %1326 = vmatpush.msra.mxu0 0.0
  %1327 = vmatpush.msra.mxu0 0.0
  %1328 = vmatpush.msra.mxu0 0.0
  %1329 = vmatpush.msra.mxu0 0.0
  %1330 = vmatpush.msra.mxu0 0.0
  %1331 = vmatpush.msra.mxu0 0.0
  %1332 = vmatpush.msra.mxu0 0.0
  %1333 = vmatpush.msra.mxu0 0.0
  %1334 = vmatpush.msra.mxu0 0.0
  %1335 = vmatpush.msra.mxu0 0.0
  %1336 = vmatpush.msra.mxu0 0.0
  %v1337 = vand.u32 %v81, 4294901760
  %1338 = vmatpush.msra.mxu0 %v1337
  %v1339 = vand.u32 %v61, 4294901760
  %v1340 = vsub.f32 %v61, %v1339
  %v1341 = vand.u32 %v1340, 4294901760
  %v1342 = vsub.f32 %v1340, %v1341
  %v1343 = vand.u32 %v1342, 4294901760
  %1344 = vmatmul.f32.gmra.mxu0 %v1343
  %v1345 = vpop.f32.mrf.mxu0
  %v1346 = vadd.f32 %v33, %v1345
  %v1347 = vand.u32 %v64, 4294901760
  %v1348 = vsub.f32 %v64, %v1347
  %v1349 = vand.u32 %v1348, 4294901760
  %v1350 = vsub.f32 %v1348, %v1349
  %v1351 = vand.u32 %v1350, 4294901760
  %1352 = vmatmul.f32.gmra.mxu0 %v1351
  %v1353 = vpop.f32.mrf.mxu0
  %v1354 = vadd.f32 %v38, %v1353
  %1355 = vdwg.mxu0
  %1356 = vmatpush.msra.mxu0 0.0
  %1357 = vmatpush.msra.mxu0 0.0
  %1358 = vmatpush.msra.mxu0 0.0
  %1359 = vmatpush.msra.mxu0 0.0
  %1360 = vmatpush.msra.mxu0 0.0
  %1361 = vmatpush.msra.mxu0 0.0
  %1362 = vmatpush.msra.mxu0 0.0
  %1363 = vmatpush.msra.mxu0 0.0
  %1364 = vmatpush.msra.mxu0 0.0
  %1365 = vmatpush.msra.mxu0 0.0
  %1366 = vmatpush.msra.mxu0 0.0
  %1367 = vmatpush.msra.mxu0 0.0
  %1368 = vmatpush.msra.mxu0 0.0
  %1369 = vmatpush.msra.mxu0 0.0
  %1370 = vmatpush.msra.mxu0 0.0
  %v1371 = vand.u32 %v81, 4294901760
  %v1372 = vsub.f32 %v81, %v1371
  %v1373 = vand.u32 %v1372, 4294901760
  %v1374 = vsub.f32 %v1372, %v1373
  %v1375 = vand.u32 %v1374, 4294901760
  %1376 = vmatpush.msra.mxu0 %v1375
  %v1377 = vand.u32 %v61, 4294901760
  %1378 = vmatmul.f32.gmra.mxu0 %v1377
  %v1379 = vpop.f32.mrf.mxu0
  %v1380 = vadd.f32 %v1346, %v1379
  %v1381 = vand.u32 %v64, 4294901760
  %1382 = vmatmul.f32.gmra.mxu0 %v1381
  %v1383 = vpop.f32.mrf.mxu0
  %v1384 = vadd.f32 %v1354, %v1383
  %1385 = vdwg.mxu0
  %1386 = vmatpush.msra.mxu0 0.0
  %1387 = vmatpush.msra.mxu0 0.0
  %1388 = vmatpush.msra.mxu0 0.0
  %1389 = vmatpush.msra.mxu0 0.0
  %1390 = vmatpush.msra.mxu0 0.0
  %1391 = vmatpush.msra.mxu0 0.0
  %1392 = vmatpush.msra.mxu0 0.0
  %1393 = vmatpush.msra.mxu0 0.0
  %1394 = vmatpush.msra.mxu0 0.0
  %1395 = vmatpush.msra.mxu0 0.0
  %1396 = vmatpush.msra.mxu0 0.0
  %1397 = vmatpush.msra.mxu0 0.0
  %1398 = vmatpush.msra.mxu0 0.0
  %1399 = vmatpush.msra.mxu0 0.0
  %1400 = vmatpush.msra.mxu0 0.0
  %v1401 = vand.u32 %v81, 4294901760
  %v1402 = vsub.f32 %v81, %v1401
  %1403 = vmatpush.msra.mxu0 %v1402
  %v1404 = vand.u32 %v61, 4294901760
  %v1405 = vsub.f32 %v61, %v1404
  %1406 = vmatmul.f32.gmra.mxu0 %v1405
  %v1407 = vpop.f32.mrf.mxu0
  %v1408 = vadd.f32 %v1380, %v1407
  %v1409 = vand.u32 %v64, 4294901760
  %v1410 = vsub.f32 %v64, %v1409
  %1411 = vmatmul.f32.gmra.mxu0 %v1410
  %v1412 = vpop.f32.mrf.mxu0
  %v1413 = vadd.f32 %v1384, %v1412
  %1414 = vdwg.mxu0
  %1415 = vmatpush.msra.mxu0 0.0
  %1416 = vmatpush.msra.mxu0 0.0
  %1417 = vmatpush.msra.mxu0 0.0
  %1418 = vmatpush.msra.mxu0 0.0
  %1419 = vmatpush.msra.mxu0 0.0
  %1420 = vmatpush.msra.mxu0 0.0
  %1421 = vmatpush.msra.mxu0 0.0
  %1422 = vmatpush.msra.mxu0 0.0
  %1423 = vmatpush.msra.mxu0 0.0
  %1424 = vmatpush.msra.mxu0 0.0
  %1425 = vmatpush.msra.mxu0 0.0
  %1426 = vmatpush.msra.mxu0 0.0
  %1427 = vmatpush.msra.mxu0 0.0
  %1428 = vmatpush.msra.mxu0 0.0
  %1429 = vmatpush.msra.mxu0 0.0
  %v1430 = vand.u32 %v81, 4294901760
  %1431 = vmatpush.msra.mxu0 %v1430
  %v1432 = vand.u32 %v61, 4294901760
  %v1433 = vsub.f32 %v61, %v1432
  %v1434 = vand.u32 %v1433, 4294901760
  %1435 = vmatmul.f32.gmra.mxu0 %v1434
  %v1436 = vpop.f32.mrf.mxu0
  %v1437 = vadd.f32 %v1408, %v1436
  %v1438 = vand.u32 %v64, 4294901760
  %v1439 = vsub.f32 %v64, %v1438
  %v1440 = vand.u32 %v1439, 4294901760
  %1441 = vmatmul.f32.gmra.mxu0 %v1440
  %v1442 = vpop.f32.mrf.mxu0
  %v1443 = vadd.f32 %v1413, %v1442
  %1444 = vdwg.mxu0
  %1445 = vmatpush.msra.mxu0 0.0
  %1446 = vmatpush.msra.mxu0 0.0
  %1447 = vmatpush.msra.mxu0 0.0
  %1448 = vmatpush.msra.mxu0 0.0
  %1449 = vmatpush.msra.mxu0 0.0
  %1450 = vmatpush.msra.mxu0 0.0
  %1451 = vmatpush.msra.mxu0 0.0
  %1452 = vmatpush.msra.mxu0 0.0
  %1453 = vmatpush.msra.mxu0 0.0
  %1454 = vmatpush.msra.mxu0 0.0
  %1455 = vmatpush.msra.mxu0 0.0
  %1456 = vmatpush.msra.mxu0 0.0
  %1457 = vmatpush.msra.mxu0 0.0
  %1458 = vmatpush.msra.mxu0 0.0
  %1459 = vmatpush.msra.mxu0 0.0
  %v1460 = vand.u32 %v81, 4294901760
  %v1461 = vsub.f32 %v81, %v1460
  %v1462 = vand.u32 %v1461, 4294901760
  %1463 = vmatpush.msra.mxu0 %v1462
  %v1464 = vand.u32 %v61, 4294901760
  %1465 = vmatmul.f32.gmra.mxu0 %v1464
  %v1466 = vpop.f32.mrf.mxu0
  %v1467 = vadd.f32 %v1437, %v1466
  %v1468 = vand.u32 %v64, 4294901760
  %1469 = vmatmul.f32.gmra.mxu0 %v1468
  %v1470 = vpop.f32.mrf.mxu0
  %v1471 = vadd.f32 %v1443, %v1470
  %1472 = vdwg.mxu0
  %1473 = vmatpush.msra.mxu0 0.0
  %1474 = vmatpush.msra.mxu0 0.0
  %1475 = vmatpush.msra.mxu0 0.0
  %1476 = vmatpush.msra.mxu0 0.0
  %1477 = vmatpush.msra.mxu0 0.0
  %1478 = vmatpush.msra.mxu0 0.0
  %1479 = vmatpush.msra.mxu0 0.0
  %1480 = vmatpush.msra.mxu0 0.0
  %1481 = vmatpush.msra.mxu0 0.0
  %1482 = vmatpush.msra.mxu0 0.0
  %1483 = vmatpush.msra.mxu0 0.0
  %1484 = vmatpush.msra.mxu0 0.0
  %1485 = vmatpush.msra.mxu0 0.0
  %1486 = vmatpush.msra.mxu0 0.0
  %1487 = vmatpush.msra.mxu0 0.0
  %v1488 = vand.u32 %v81, 4294901760
  %1489 = vmatpush.msra.mxu0 %v1488
  %v1490 = vand.u32 %v61, 4294901760
  %1491 = vmatmul.f32.gmra.mxu0 %v1490
  %v1492 = vpop.f32.mrf.mxu0
  %v1493 = vadd.f32 %v1467, %v1492
  %v1494 = vand.u32 %v64, 4294901760
  %1495 = vmatmul.f32.gmra.mxu0 %v1494
  %v1496 = vpop.f32.mrf.mxu0
  %v1497 = vadd.f32 %v1471, %v1496
  %1498 = vdwg.mxu0
  %v1499 = vmax.f32 %v254, 0.0
  %v1500 = vmax.f32 %v431, 0.0
  %v1501 = vmax.f32 %v608, 0.0
  %v1502 = vmax.f32 %v785, 0.0
  %v1503 = vmax.f32 %v962, 0.0
  %v1504 = vmax.f32 %v1139, 0.0
  %v1505 = vmax.f32 %v1316, 0.0
  %v1506 = vmax.f32 %v1493, 0.0
  %v1507 = vmax.f32 %v258, 0.0
  %v1508 = vmax.f32 %v435, 0.0
  %v1509 = vmax.f32 %v612, 0.0
  %v1510 = vmax.f32 %v789, 0.0
  %v1511 = vmax.f32 %v966, 0.0
  %v1512 = vmax.f32 %v1143, 0.0
  %v1513 = vmax.f32 %v1320, 0.0
  %v1514 = vmax.f32 %v1497, 0.0
  %1516 = vset.pattern.permute.xlu0 0
  %1517 = vperm.xlu0 %1516, %v25
  %v1518 = vpop.permute.xlu0 %1517
  %vm1520 = vcmask 80896
  %v1522 = vsel %vm1520, %v24, 0
  %vm1524 = vcmask 1041408
  %v1526 = vsel %vm1524, %v1507, 0
  %v1529 = vsel %vm1524, %v1508, 0
  %v1532 = vsel %vm1524, %v1509, 0
  %v1535 = vsel %vm1524, %v1510, 0
  %v1538 = vsel %vm1524, %v1511, 0
  %v1541 = vsel %vm1524, %v1512, 0
  %v1544 = vsel %vm1524, %v1513, 0
  %v1547 = vsel %vm1524, %v1514, 0
  %1549 = vmatpush.msra.mxu0 0.0
  %1550 = vmatpush.msra.mxu0 0.0
  %1551 = vmatpush.msra.mxu0 0.0
  %1552 = vmatpush.msra.mxu0 0.0
  %1553 = vmatpush.msra.mxu0 0.0
  %1554 = vmatpush.msra.mxu0 0.0
  %1555 = vmatpush.msra.mxu0 0.0
  %1556 = vmatpush.msra.mxu0 0.0
  %1557 = vmatpush.msra.mxu0 0.0
  %1558 = vmatpush.msra.mxu0 0.0
  %1559 = vmatpush.msra.mxu0 0.0
  %1560 = vmatpush.msra.mxu0 0.0
  %1561 = vmatpush.msra.mxu0 0.0
  %1562 = vmatpush.msra.mxu0 0.0
  %v1563 = vand.u32 %v1526, 4294901760
  %1564 = vmatpush.msra.mxu0 %v1563
  %v1565 = vand.u32 %v1499, 4294901760
  %1566 = vmatpush.msra.mxu0 %v1565
  %v1567 = vand.u32 %v1522, 4294901760
  %v1568 = vsub.f32 %v1522, %v1567
  %v1569 = vand.u32 %v1568, 4294901760
  %v1570 = vsub.f32 %v1568, %v1569
  %v1571 = vand.u32 %v1570, 4294901760
  %1572 = vmatmul.f32.gmra.mxu0 %v1571
  %v1573 = vpop.f32.mrf.mxu0
  %v1574 = vadd.f32 %v1518, %v1573
  %1575 = vdwg.mxu0
  %1576 = vmatpush.msra.mxu0 0.0
  %1577 = vmatpush.msra.mxu0 0.0
  %1578 = vmatpush.msra.mxu0 0.0
  %1579 = vmatpush.msra.mxu0 0.0
  %1580 = vmatpush.msra.mxu0 0.0
  %1581 = vmatpush.msra.mxu0 0.0
  %1582 = vmatpush.msra.mxu0 0.0
  %1583 = vmatpush.msra.mxu0 0.0
  %1584 = vmatpush.msra.mxu0 0.0
  %1585 = vmatpush.msra.mxu0 0.0
  %1586 = vmatpush.msra.mxu0 0.0
  %1587 = vmatpush.msra.mxu0 0.0
  %1588 = vmatpush.msra.mxu0 0.0
  %1589 = vmatpush.msra.mxu0 0.0
  %v1590 = vand.u32 %v1526, 4294901760
  %v1591 = vsub.f32 %v1526, %v1590
  %v1592 = vand.u32 %v1591, 4294901760
  %v1593 = vsub.f32 %v1591, %v1592
  %v1594 = vand.u32 %v1593, 4294901760
  %1595 = vmatpush.msra.mxu0 %v1594
  %v1596 = vand.u32 %v1499, 4294901760
  %v1597 = vsub.f32 %v1499, %v1596
  %v1598 = vand.u32 %v1597, 4294901760
  %v1599 = vsub.f32 %v1597, %v1598
  %v1600 = vand.u32 %v1599, 4294901760
  %1601 = vmatpush.msra.mxu0 %v1600
  %v1602 = vand.u32 %v1522, 4294901760
  %1603 = vmatmul.f32.gmra.mxu0 %v1602
  %v1604 = vpop.f32.mrf.mxu0
  %v1605 = vadd.f32 %v1574, %v1604
  %1606 = vdwg.mxu0
  %1607 = vmatpush.msra.mxu0 0.0
  %1608 = vmatpush.msra.mxu0 0.0
  %1609 = vmatpush.msra.mxu0 0.0
  %1610 = vmatpush.msra.mxu0 0.0
  %1611 = vmatpush.msra.mxu0 0.0
  %1612 = vmatpush.msra.mxu0 0.0
  %1613 = vmatpush.msra.mxu0 0.0
  %1614 = vmatpush.msra.mxu0 0.0
  %1615 = vmatpush.msra.mxu0 0.0
  %1616 = vmatpush.msra.mxu0 0.0
  %1617 = vmatpush.msra.mxu0 0.0
  %1618 = vmatpush.msra.mxu0 0.0
  %1619 = vmatpush.msra.mxu0 0.0
  %1620 = vmatpush.msra.mxu0 0.0
  %v1621 = vand.u32 %v1526, 4294901760
  %v1622 = vsub.f32 %v1526, %v1621
  %1623 = vmatpush.msra.mxu0 %v1622
  %v1624 = vand.u32 %v1499, 4294901760
  %v1625 = vsub.f32 %v1499, %v1624
  %1626 = vmatpush.msra.mxu0 %v1625
  %v1627 = vand.u32 %v1522, 4294901760
  %v1628 = vsub.f32 %v1522, %v1627
  %1629 = vmatmul.f32.gmra.mxu0 %v1628
  %v1630 = vpop.f32.mrf.mxu0
  %v1631 = vadd.f32 %v1605, %v1630
  %1632 = vdwg.mxu0
  %1633 = vmatpush.msra.mxu0 0.0
  %1634 = vmatpush.msra.mxu0 0.0
  %1635 = vmatpush.msra.mxu0 0.0
  %1636 = vmatpush.msra.mxu0 0.0
  %1637 = vmatpush.msra.mxu0 0.0
  %1638 = vmatpush.msra.mxu0 0.0
  %1639 = vmatpush.msra.mxu0 0.0
  %1640 = vmatpush.msra.mxu0 0.0
  %1641 = vmatpush.msra.mxu0 0.0
  %1642 = vmatpush.msra.mxu0 0.0
  %1643 = vmatpush.msra.mxu0 0.0
  %1644 = vmatpush.msra.mxu0 0.0
  %1645 = vmatpush.msra.mxu0 0.0
  %1646 = vmatpush.msra.mxu0 0.0
  %v1647 = vand.u32 %v1526, 4294901760
  %1648 = vmatpush.msra.mxu0 %v1647
  %v1649 = vand.u32 %v1499, 4294901760
  %1650 = vmatpush.msra.mxu0 %v1649
  %v1651 = vand.u32 %v1522, 4294901760
  %v1652 = vsub.f32 %v1522, %v1651
  %v1653 = vand.u32 %v1652, 4294901760
  %1654 = vmatmul.f32.gmra.mxu0 %v1653
  %v1655 = vpop.f32.mrf.mxu0
  %v1656 = vadd.f32 %v1631, %v1655
  %1657 = vdwg.mxu0
  %1658 = vmatpush.msra.mxu0 0.0
  %1659 = vmatpush.msra.mxu0 0.0
  %1660 = vmatpush.msra.mxu0 0.0
  %1661 = vmatpush.msra.mxu0 0.0
  %1662 = vmatpush.msra.mxu0 0.0
  %1663 = vmatpush.msra.mxu0 0.0
  %1664 = vmatpush.msra.mxu0 0.0
  %1665 = vmatpush.msra.mxu0 0.0
  %1666 = vmatpush.msra.mxu0 0.0
  %1667 = vmatpush.msra.mxu0 0.0
  %1668 = vmatpush.msra.mxu0 0.0
  %1669 = vmatpush.msra.mxu0 0.0
  %1670 = vmatpush.msra.mxu0 0.0
  %1671 = vmatpush.msra.mxu0 0.0
  %v1672 = vand.u32 %v1526, 4294901760
  %v1673 = vsub.f32 %v1526, %v1672
  %v1674 = vand.u32 %v1673, 4294901760
  %1675 = vmatpush.msra.mxu0 %v1674
  %v1676 = vand.u32 %v1499, 4294901760
  %v1677 = vsub.f32 %v1499, %v1676
  %v1678 = vand.u32 %v1677, 4294901760
  %1679 = vmatpush.msra.mxu0 %v1678
  %v1680 = vand.u32 %v1522, 4294901760
  %1681 = vmatmul.f32.gmra.mxu0 %v1680
  %v1682 = vpop.f32.mrf.mxu0
  %v1683 = vadd.f32 %v1656, %v1682
  %1684 = vdwg.mxu0
  %1685 = vmatpush.msra.mxu0 0.0
  %1686 = vmatpush.msra.mxu0 0.0
  %1687 = vmatpush.msra.mxu0 0.0
  %1688 = vmatpush.msra.mxu0 0.0
  %1689 = vmatpush.msra.mxu0 0.0
  %1690 = vmatpush.msra.mxu0 0.0
  %1691 = vmatpush.msra.mxu0 0.0
  %1692 = vmatpush.msra.mxu0 0.0
  %1693 = vmatpush.msra.mxu0 0.0
  %1694 = vmatpush.msra.mxu0 0.0
  %1695 = vmatpush.msra.mxu0 0.0
  %1696 = vmatpush.msra.mxu0 0.0
  %1697 = vmatpush.msra.mxu0 0.0
  %1698 = vmatpush.msra.mxu0 0.0
  %v1699 = vand.u32 %v1526, 4294901760
  %1700 = vmatpush.msra.mxu0 %v1699
  %v1701 = vand.u32 %v1499, 4294901760
  %1702 = vmatpush.msra.mxu0 %v1701
  %v1703 = vand.u32 %v1522, 4294901760
  %1704 = vmatmul.f32.gmra.mxu0 %v1703
  %v1705 = vpop.f32.mrf.mxu0
  %v1706 = vadd.f32 %v1683, %v1705
  %1707 = vdwg.mxu0
  %1708 = vmatpush.msra.mxu0 0.0
  %1709 = vmatpush.msra.mxu0 0.0
  %1710 = vmatpush.msra.mxu0 0.0
  %1711 = vmatpush.msra.mxu0 0.0
  %1712 = vmatpush.msra.mxu0 0.0
  %1713 = vmatpush.msra.mxu0 0.0
  %1714 = vmatpush.msra.mxu0 0.0
  %1715 = vmatpush.msra.mxu0 0.0
  %1716 = vmatpush.msra.mxu0 0.0
  %1717 = vmatpush.msra.mxu0 0.0
  %1718 = vmatpush.msra.mxu0 0.0
  %1719 = vmatpush.msra.mxu0 0.0
  %1720 = vmatpush.msra.mxu0 0.0
  %1721 = vmatpush.msra.mxu0 0.0
  %v1722 = vand.u32 %v1529, 4294901760
  %1723 = vmatpush.msra.mxu0 %v1722
  %v1724 = vand.u32 %v1500, 4294901760
  %1725 = vmatpush.msra.mxu0 %v1724
  %v1726 = vand.u32 %v1522, 4294901760
  %v1727 = vsub.f32 %v1522, %v1726
  %v1728 = vand.u32 %v1727, 4294901760
  %v1729 = vsub.f32 %v1727, %v1728
  %v1730 = vand.u32 %v1729, 4294901760
  %1731 = vmatmul.f32.gmra.mxu0 %v1730
  %v1732 = vpop.f32.mrf.mxu0
  %v1733 = vadd.f32 %v1518, %v1732
  %1734 = vdwg.mxu0
  %1735 = vmatpush.msra.mxu0 0.0
  %1736 = vmatpush.msra.mxu0 0.0
  %1737 = vmatpush.msra.mxu0 0.0
  %1738 = vmatpush.msra.mxu0 0.0
  %1739 = vmatpush.msra.mxu0 0.0
  %1740 = vmatpush.msra.mxu0 0.0
  %1741 = vmatpush.msra.mxu0 0.0
  %1742 = vmatpush.msra.mxu0 0.0
  %1743 = vmatpush.msra.mxu0 0.0
  %1744 = vmatpush.msra.mxu0 0.0
  %1745 = vmatpush.msra.mxu0 0.0
  %1746 = vmatpush.msra.mxu0 0.0
  %1747 = vmatpush.msra.mxu0 0.0
  %1748 = vmatpush.msra.mxu0 0.0
  %v1749 = vand.u32 %v1529, 4294901760
  %v1750 = vsub.f32 %v1529, %v1749
  %v1751 = vand.u32 %v1750, 4294901760
  %v1752 = vsub.f32 %v1750, %v1751
  %v1753 = vand.u32 %v1752, 4294901760
  %1754 = vmatpush.msra.mxu0 %v1753
  %v1755 = vand.u32 %v1500, 4294901760
  %v1756 = vsub.f32 %v1500, %v1755
  %v1757 = vand.u32 %v1756, 4294901760
  %v1758 = vsub.f32 %v1756, %v1757
  %v1759 = vand.u32 %v1758, 4294901760
  %1760 = vmatpush.msra.mxu0 %v1759
  %v1761 = vand.u32 %v1522, 4294901760
  %1762 = vmatmul.f32.gmra.mxu0 %v1761
  %v1763 = vpop.f32.mrf.mxu0
  %v1764 = vadd.f32 %v1733, %v1763
  %1765 = vdwg.mxu0
  %1766 = vmatpush.msra.mxu0 0.0
  %1767 = vmatpush.msra.mxu0 0.0
  %1768 = vmatpush.msra.mxu0 0.0
  %1769 = vmatpush.msra.mxu0 0.0
  %1770 = vmatpush.msra.mxu0 0.0
  %1771 = vmatpush.msra.mxu0 0.0
  %1772 = vmatpush.msra.mxu0 0.0
  %1773 = vmatpush.msra.mxu0 0.0
  %1774 = vmatpush.msra.mxu0 0.0
  %1775 = vmatpush.msra.mxu0 0.0
  %1776 = vmatpush.msra.mxu0 0.0
  %1777 = vmatpush.msra.mxu0 0.0
  %1778 = vmatpush.msra.mxu0 0.0
  %1779 = vmatpush.msra.mxu0 0.0
  %v1780 = vand.u32 %v1529, 4294901760
  %v1781 = vsub.f32 %v1529, %v1780
  %1782 = vmatpush.msra.mxu0 %v1781
  %v1783 = vand.u32 %v1500, 4294901760
  %v1784 = vsub.f32 %v1500, %v1783
  %1785 = vmatpush.msra.mxu0 %v1784
  %v1786 = vand.u32 %v1522, 4294901760
  %v1787 = vsub.f32 %v1522, %v1786
  %1788 = vmatmul.f32.gmra.mxu0 %v1787
  %v1789 = vpop.f32.mrf.mxu0
  %v1790 = vadd.f32 %v1764, %v1789
  %1791 = vdwg.mxu0
  %1792 = vmatpush.msra.mxu0 0.0
  %1793 = vmatpush.msra.mxu0 0.0
  %1794 = vmatpush.msra.mxu0 0.0
  %1795 = vmatpush.msra.mxu0 0.0
  %1796 = vmatpush.msra.mxu0 0.0
  %1797 = vmatpush.msra.mxu0 0.0
  %1798 = vmatpush.msra.mxu0 0.0
  %1799 = vmatpush.msra.mxu0 0.0
  %1800 = vmatpush.msra.mxu0 0.0
  %1801 = vmatpush.msra.mxu0 0.0
  %1802 = vmatpush.msra.mxu0 0.0
  %1803 = vmatpush.msra.mxu0 0.0
  %1804 = vmatpush.msra.mxu0 0.0
  %1805 = vmatpush.msra.mxu0 0.0
  %v1806 = vand.u32 %v1529, 4294901760
  %1807 = vmatpush.msra.mxu0 %v1806
  %v1808 = vand.u32 %v1500, 4294901760
  %1809 = vmatpush.msra.mxu0 %v1808
  %v1810 = vand.u32 %v1522, 4294901760
  %v1811 = vsub.f32 %v1522, %v1810
  %v1812 = vand.u32 %v1811, 4294901760
  %1813 = vmatmul.f32.gmra.mxu0 %v1812
  %v1814 = vpop.f32.mrf.mxu0
  %v1815 = vadd.f32 %v1790, %v1814
  %1816 = vdwg.mxu0
  %1817 = vmatpush.msra.mxu0 0.0
  %1818 = vmatpush.msra.mxu0 0.0
  %1819 = vmatpush.msra.mxu0 0.0
  %1820 = vmatpush.msra.mxu0 0.0
  %1821 = vmatpush.msra.mxu0 0.0
  %1822 = vmatpush.msra.mxu0 0.0
  %1823 = vmatpush.msra.mxu0 0.0
  %1824 = vmatpush.msra.mxu0 0.0
  %1825 = vmatpush.msra.mxu0 0.0
  %1826 = vmatpush.msra.mxu0 0.0
  %1827 = vmatpush.msra.mxu0 0.0
  %1828 = vmatpush.msra.mxu0 0.0
  %1829 = vmatpush.msra.mxu0 0.0
  %1830 = vmatpush.msra.mxu0 0.0
  %v1831 = vand.u32 %v1529, 4294901760
  %v1832 = vsub.f32 %v1529, %v1831
  %v1833 = vand.u32 %v1832, 4294901760
  %1834 = vmatpush.msra.mxu0 %v1833
  %v1835 = vand.u32 %v1500, 4294901760
  %v1836 = vsub.f32 %v1500, %v1835
  %v1837 = vand.u32 %v1836, 4294901760
  %1838 = vmatpush.msra.mxu0 %v1837
  %v1839 = vand.u32 %v1522, 4294901760
  %1840 = vmatmul.f32.gmra.mxu0 %v1839
  %v1841 = vpop.f32.mrf.mxu0
  %v1842 = vadd.f32 %v1815, %v1841
  %1843 = vdwg.mxu0
  %1844 = vmatpush.msra.mxu0 0.0
  %1845 = vmatpush.msra.mxu0 0.0
  %1846 = vmatpush.msra.mxu0 0.0
  %1847 = vmatpush.msra.mxu0 0.0
  %1848 = vmatpush.msra.mxu0 0.0
  %1849 = vmatpush.msra.mxu0 0.0
  %1850 = vmatpush.msra.mxu0 0.0
  %1851 = vmatpush.msra.mxu0 0.0
  %1852 = vmatpush.msra.mxu0 0.0
  %1853 = vmatpush.msra.mxu0 0.0
  %1854 = vmatpush.msra.mxu0 0.0
  %1855 = vmatpush.msra.mxu0 0.0
  %1856 = vmatpush.msra.mxu0 0.0
  %1857 = vmatpush.msra.mxu0 0.0
  %v1858 = vand.u32 %v1529, 4294901760
  %1859 = vmatpush.msra.mxu0 %v1858
  %v1860 = vand.u32 %v1500, 4294901760
  %1861 = vmatpush.msra.mxu0 %v1860
  %v1862 = vand.u32 %v1522, 4294901760
  %1863 = vmatmul.f32.gmra.mxu0 %v1862
  %v1864 = vpop.f32.mrf.mxu0
  %v1865 = vadd.f32 %v1842, %v1864
  %1866 = vdwg.mxu0
  %1867 = vmatpush.msra.mxu0 0.0
  %1868 = vmatpush.msra.mxu0 0.0
  %1869 = vmatpush.msra.mxu0 0.0
  %1870 = vmatpush.msra.mxu0 0.0
  %1871 = vmatpush.msra.mxu0 0.0
  %1872 = vmatpush.msra.mxu0 0.0
  %1873 = vmatpush.msra.mxu0 0.0
  %1874 = vmatpush.msra.mxu0 0.0
  %1875 = vmatpush.msra.mxu0 0.0
  %1876 = vmatpush.msra.mxu0 0.0
  %1877 = vmatpush.msra.mxu0 0.0
  %1878 = vmatpush.msra.mxu0 0.0
  %1879 = vmatpush.msra.mxu0 0.0
  %1880 = vmatpush.msra.mxu0 0.0
  %v1881 = vand.u32 %v1532, 4294901760
  %1882 = vmatpush.msra.mxu0 %v1881
  %v1883 = vand.u32 %v1501, 4294901760
  %1884 = vmatpush.msra.mxu0 %v1883
  %v1885 = vand.u32 %v1522, 4294901760
  %v1886 = vsub.f32 %v1522, %v1885
  %v1887 = vand.u32 %v1886, 4294901760
  %v1888 = vsub.f32 %v1886, %v1887
  %v1889 = vand.u32 %v1888, 4294901760
  %1890 = vmatmul.f32.gmra.mxu0 %v1889
  %v1891 = vpop.f32.mrf.mxu0
  %v1892 = vadd.f32 %v1518, %v1891
  %1893 = vdwg.mxu0
  %1894 = vmatpush.msra.mxu0 0.0
  %1895 = vmatpush.msra.mxu0 0.0
  %1896 = vmatpush.msra.mxu0 0.0
  %1897 = vmatpush.msra.mxu0 0.0
  %1898 = vmatpush.msra.mxu0 0.0
  %1899 = vmatpush.msra.mxu0 0.0
  %1900 = vmatpush.msra.mxu0 0.0
  %1901 = vmatpush.msra.mxu0 0.0
  %1902 = vmatpush.msra.mxu0 0.0
  %1903 = vmatpush.msra.mxu0 0.0
  %1904 = vmatpush.msra.mxu0 0.0
  %1905 = vmatpush.msra.mxu0 0.0
  %1906 = vmatpush.msra.mxu0 0.0
  %1907 = vmatpush.msra.mxu0 0.0
  %v1908 = vand.u32 %v1532, 4294901760
  %v1909 = vsub.f32 %v1532, %v1908
  %v1910 = vand.u32 %v1909, 4294901760
  %v1911 = vsub.f32 %v1909, %v1910
  %v1912 = vand.u32 %v1911, 4294901760
  %1913 = vmatpush.msra.mxu0 %v1912
  %v1914 = vand.u32 %v1501, 4294901760
  %v1915 = vsub.f32 %v1501, %v1914
  %v1916 = vand.u32 %v1915, 4294901760
  %v1917 = vsub.f32 %v1915, %v1916
  %v1918 = vand.u32 %v1917, 4294901760
  %1919 = vmatpush.msra.mxu0 %v1918
  %v1920 = vand.u32 %v1522, 4294901760
  %1921 = vmatmul.f32.gmra.mxu0 %v1920
  %v1922 = vpop.f32.mrf.mxu0
  %v1923 = vadd.f32 %v1892, %v1922
  %1924 = vdwg.mxu0
  %1925 = vmatpush.msra.mxu0 0.0
  %1926 = vmatpush.msra.mxu0 0.0
  %1927 = vmatpush.msra.mxu0 0.0
  %1928 = vmatpush.msra.mxu0 0.0
  %1929 = vmatpush.msra.mxu0 0.0
  %1930 = vmatpush.msra.mxu0 0.0
  %1931 = vmatpush.msra.mxu0 0.0
  %1932 = vmatpush.msra.mxu0 0.0
  %1933 = vmatpush.msra.mxu0 0.0
  %1934 = vmatpush.msra.mxu0 0.0
  %1935 = vmatpush.msra.mxu0 0.0
  %1936 = vmatpush.msra.mxu0 0.0
  %1937 = vmatpush.msra.mxu0 0.0
  %1938 = vmatpush.msra.mxu0 0.0
  %v1939 = vand.u32 %v1532, 4294901760
  %v1940 = vsub.f32 %v1532, %v1939
  %1941 = vmatpush.msra.mxu0 %v1940
  %v1942 = vand.u32 %v1501, 4294901760
  %v1943 = vsub.f32 %v1501, %v1942
  %1944 = vmatpush.msra.mxu0 %v1943
  %v1945 = vand.u32 %v1522, 4294901760
  %v1946 = vsub.f32 %v1522, %v1945
  %1947 = vmatmul.f32.gmra.mxu0 %v1946
  %v1948 = vpop.f32.mrf.mxu0
  %v1949 = vadd.f32 %v1923, %v1948
  %1950 = vdwg.mxu0
  %1951 = vmatpush.msra.mxu0 0.0
  %1952 = vmatpush.msra.mxu0 0.0
  %1953 = vmatpush.msra.mxu0 0.0
  %1954 = vmatpush.msra.mxu0 0.0
  %1955 = vmatpush.msra.mxu0 0.0
  %1956 = vmatpush.msra.mxu0 0.0
  %1957 = vmatpush.msra.mxu0 0.0
  %1958 = vmatpush.msra.mxu0 0.0
  %1959 = vmatpush.msra.mxu0 0.0
  %1960 = vmatpush.msra.mxu0 0.0
  %1961 = vmatpush.msra.mxu0 0.0
  %1962 = vmatpush.msra.mxu0 0.0
  %1963 = vmatpush.msra.mxu0 0.0
  %1964 = vmatpush.msra.mxu0 0.0
  %v1965 = vand.u32 %v1532, 4294901760
  %1966 = vmatpush.msra.mxu0 %v1965
  %v1967 = vand.u32 %v1501, 4294901760
  %1968 = vmatpush.msra.mxu0 %v1967
  %v1969 = vand.u32 %v1522, 4294901760
  %v1970 = vsub.f32 %v1522, %v1969
  %v1971 = vand.u32 %v1970, 4294901760
  %1972 = vmatmul.f32.gmra.mxu0 %v1971
  %v1973 = vpop.f32.mrf.mxu0
  %v1974 = vadd.f32 %v1949, %v1973
  %1975 = vdwg.mxu0
  %1976 = vmatpush.msra.mxu0 0.0
  %1977 = vmatpush.msra.mxu0 0.0
  %1978 = vmatpush.msra.mxu0 0.0
  %1979 = vmatpush.msra.mxu0 0.0
  %1980 = vmatpush.msra.mxu0 0.0
  %1981 = vmatpush.msra.mxu0 0.0
  %1982 = vmatpush.msra.mxu0 0.0
  %1983 = vmatpush.msra.mxu0 0.0
  %1984 = vmatpush.msra.mxu0 0.0
  %1985 = vmatpush.msra.mxu0 0.0
  %1986 = vmatpush.msra.mxu0 0.0
  %1987 = vmatpush.msra.mxu0 0.0
  %1988 = vmatpush.msra.mxu0 0.0
  %1989 = vmatpush.msra.mxu0 0.0
  %v1990 = vand.u32 %v1532, 4294901760
  %v1991 = vsub.f32 %v1532, %v1990
  %v1992 = vand.u32 %v1991, 4294901760
  %1993 = vmatpush.msra.mxu0 %v1992
  %v1994 = vand.u32 %v1501, 4294901760
  %v1995 = vsub.f32 %v1501, %v1994
  %v1996 = vand.u32 %v1995, 4294901760
  %1997 = vmatpush.msra.mxu0 %v1996
  %v1998 = vand.u32 %v1522, 4294901760
  %1999 = vmatmul.f32.gmra.mxu0 %v1998
  %v2000 = vpop.f32.mrf.mxu0
  %v2001 = vadd.f32 %v1974, %v2000
  %2002 = vdwg.mxu0
  %2003 = vmatpush.msra.mxu0 0.0
  %2004 = vmatpush.msra.mxu0 0.0
  %2005 = vmatpush.msra.mxu0 0.0
  %2006 = vmatpush.msra.mxu0 0.0
  %2007 = vmatpush.msra.mxu0 0.0
  %2008 = vmatpush.msra.mxu0 0.0
  %2009 = vmatpush.msra.mxu0 0.0
  %2010 = vmatpush.msra.mxu0 0.0
  %2011 = vmatpush.msra.mxu0 0.0
  %2012 = vmatpush.msra.mxu0 0.0
  %2013 = vmatpush.msra.mxu0 0.0
  %2014 = vmatpush.msra.mxu0 0.0
  %2015 = vmatpush.msra.mxu0 0.0
  %2016 = vmatpush.msra.mxu0 0.0
  %v2017 = vand.u32 %v1532, 4294901760
  %2018 = vmatpush.msra.mxu0 %v2017
  %v2019 = vand.u32 %v1501, 4294901760
  %2020 = vmatpush.msra.mxu0 %v2019
  %v2021 = vand.u32 %v1522, 4294901760
  %2022 = vmatmul.f32.gmra.mxu0 %v2021
  %v2023 = vpop.f32.mrf.mxu0
  %v2024 = vadd.f32 %v2001, %v2023
  %2025 = vdwg.mxu0
  %2026 = vmatpush.msra.mxu0 0.0
  %2027 = vmatpush.msra.mxu0 0.0
  %2028 = vmatpush.msra.mxu0 0.0
  %2029 = vmatpush.msra.mxu0 0.0
  %2030 = vmatpush.msra.mxu0 0.0
  %2031 = vmatpush.msra.mxu0 0.0
  %2032 = vmatpush.msra.mxu0 0.0
  %2033 = vmatpush.msra.mxu0 0.0
  %2034 = vmatpush.msra.mxu0 0.0
  %2035 = vmatpush.msra.mxu0 0.0
  %2036 = vmatpush.msra.mxu0 0.0
  %2037 = vmatpush.msra.mxu0 0.0
  %2038 = vmatpush.msra.mxu0 0.0
  %2039 = vmatpush.msra.mxu0 0.0
  %v2040 = vand.u32 %v1535, 4294901760
  %2041 = vmatpush.msra.mxu0 %v2040
  %v2042 = vand.u32 %v1502, 4294901760
  %2043 = vmatpush.msra.mxu0 %v2042
  %v2044 = vand.u32 %v1522, 4294901760
  %v2045 = vsub.f32 %v1522, %v2044
  %v2046 = vand.u32 %v2045, 4294901760
  %v2047 = vsub.f32 %v2045, %v2046
  %v2048 = vand.u32 %v2047, 4294901760
  %2049 = vmatmul.f32.gmra.mxu0 %v2048
  %v2050 = vpop.f32.mrf.mxu0
  %v2051 = vadd.f32 %v1518, %v2050
  %2052 = vdwg.mxu0
  %2053 = vmatpush.msra.mxu0 0.0
  %2054 = vmatpush.msra.mxu0 0.0
  %2055 = vmatpush.msra.mxu0 0.0
  %2056 = vmatpush.msra.mxu0 0.0
  %2057 = vmatpush.msra.mxu0 0.0
  %2058 = vmatpush.msra.mxu0 0.0
  %2059 = vmatpush.msra.mxu0 0.0
  %2060 = vmatpush.msra.mxu0 0.0
  %2061 = vmatpush.msra.mxu0 0.0
  %2062 = vmatpush.msra.mxu0 0.0
  %2063 = vmatpush.msra.mxu0 0.0
  %2064 = vmatpush.msra.mxu0 0.0
  %2065 = vmatpush.msra.mxu0 0.0
  %2066 = vmatpush.msra.mxu0 0.0
  %v2067 = vand.u32 %v1535, 4294901760
  %v2068 = vsub.f32 %v1535, %v2067
  %v2069 = vand.u32 %v2068, 4294901760
  %v2070 = vsub.f32 %v2068, %v2069
  %v2071 = vand.u32 %v2070, 4294901760
  %2072 = vmatpush.msra.mxu0 %v2071
  %v2073 = vand.u32 %v1502, 4294901760
  %v2074 = vsub.f32 %v1502, %v2073
  %v2075 = vand.u32 %v2074, 4294901760
  %v2076 = vsub.f32 %v2074, %v2075
  %v2077 = vand.u32 %v2076, 4294901760
  %2078 = vmatpush.msra.mxu0 %v2077
  %v2079 = vand.u32 %v1522, 4294901760
  %2080 = vmatmul.f32.gmra.mxu0 %v2079
  %v2081 = vpop.f32.mrf.mxu0
  %v2082 = vadd.f32 %v2051, %v2081
  %2083 = vdwg.mxu0
  %2084 = vmatpush.msra.mxu0 0.0
  %2085 = vmatpush.msra.mxu0 0.0
  %2086 = vmatpush.msra.mxu0 0.0
  %2087 = vmatpush.msra.mxu0 0.0
  %2088 = vmatpush.msra.mxu0 0.0
  %2089 = vmatpush.msra.mxu0 0.0
  %2090 = vmatpush.msra.mxu0 0.0
  %2091 = vmatpush.msra.mxu0 0.0
  %2092 = vmatpush.msra.mxu0 0.0
  %2093 = vmatpush.msra.mxu0 0.0
  %2094 = vmatpush.msra.mxu0 0.0
  %2095 = vmatpush.msra.mxu0 0.0
  %2096 = vmatpush.msra.mxu0 0.0
  %2097 = vmatpush.msra.mxu0 0.0
  %v2098 = vand.u32 %v1535, 4294901760
  %v2099 = vsub.f32 %v1535, %v2098
  %2100 = vmatpush.msra.mxu0 %v2099
  %v2101 = vand.u32 %v1502, 4294901760
  %v2102 = vsub.f32 %v1502, %v2101
  %2103 = vmatpush.msra.mxu0 %v2102
  %v2104 = vand.u32 %v1522, 4294901760
  %v2105 = vsub.f32 %v1522, %v2104
  %2106 = vmatmul.f32.gmra.mxu0 %v2105
  %v2107 = vpop.f32.mrf.mxu0
  %v2108 = vadd.f32 %v2082, %v2107
  %2109 = vdwg.mxu0
  %2110 = vmatpush.msra.mxu0 0.0
  %2111 = vmatpush.msra.mxu0 0.0
  %2112 = vmatpush.msra.mxu0 0.0
  %2113 = vmatpush.msra.mxu0 0.0
  %2114 = vmatpush.msra.mxu0 0.0
  %2115 = vmatpush.msra.mxu0 0.0
  %2116 = vmatpush.msra.mxu0 0.0
  %2117 = vmatpush.msra.mxu0 0.0
  %2118 = vmatpush.msra.mxu0 0.0
  %2119 = vmatpush.msra.mxu0 0.0
  %2120 = vmatpush.msra.mxu0 0.0
  %2121 = vmatpush.msra.mxu0 0.0
  %2122 = vmatpush.msra.mxu0 0.0
  %2123 = vmatpush.msra.mxu0 0.0
  %v2124 = vand.u32 %v1535, 4294901760
  %2125 = vmatpush.msra.mxu0 %v2124
  %v2126 = vand.u32 %v1502, 4294901760
  %2127 = vmatpush.msra.mxu0 %v2126
  %v2128 = vand.u32 %v1522, 4294901760
  %v2129 = vsub.f32 %v1522, %v2128
  %v2130 = vand.u32 %v2129, 4294901760
  %2131 = vmatmul.f32.gmra.mxu0 %v2130
  %v2132 = vpop.f32.mrf.mxu0
  %v2133 = vadd.f32 %v2108, %v2132
  %2134 = vdwg.mxu0
  %2135 = vmatpush.msra.mxu0 0.0
  %2136 = vmatpush.msra.mxu0 0.0
  %2137 = vmatpush.msra.mxu0 0.0
  %2138 = vmatpush.msra.mxu0 0.0
  %2139 = vmatpush.msra.mxu0 0.0
  %2140 = vmatpush.msra.mxu0 0.0
  %2141 = vmatpush.msra.mxu0 0.0
  %2142 = vmatpush.msra.mxu0 0.0
  %2143 = vmatpush.msra.mxu0 0.0
  %2144 = vmatpush.msra.mxu0 0.0
  %2145 = vmatpush.msra.mxu0 0.0
  %2146 = vmatpush.msra.mxu0 0.0
  %2147 = vmatpush.msra.mxu0 0.0
  %2148 = vmatpush.msra.mxu0 0.0
  %v2149 = vand.u32 %v1535, 4294901760
  %v2150 = vsub.f32 %v1535, %v2149
  %v2151 = vand.u32 %v2150, 4294901760
  %2152 = vmatpush.msra.mxu0 %v2151
  %v2153 = vand.u32 %v1502, 4294901760
  %v2154 = vsub.f32 %v1502, %v2153
  %v2155 = vand.u32 %v2154, 4294901760
  %2156 = vmatpush.msra.mxu0 %v2155
  %v2157 = vand.u32 %v1522, 4294901760
  %2158 = vmatmul.f32.gmra.mxu0 %v2157
  %v2159 = vpop.f32.mrf.mxu0
  %v2160 = vadd.f32 %v2133, %v2159
  %2161 = vdwg.mxu0
  %2162 = vmatpush.msra.mxu0 0.0
  %2163 = vmatpush.msra.mxu0 0.0
  %2164 = vmatpush.msra.mxu0 0.0
  %2165 = vmatpush.msra.mxu0 0.0
  %2166 = vmatpush.msra.mxu0 0.0
  %2167 = vmatpush.msra.mxu0 0.0
  %2168 = vmatpush.msra.mxu0 0.0
  %2169 = vmatpush.msra.mxu0 0.0
  %2170 = vmatpush.msra.mxu0 0.0
  %2171 = vmatpush.msra.mxu0 0.0
  %2172 = vmatpush.msra.mxu0 0.0
  %2173 = vmatpush.msra.mxu0 0.0
  %2174 = vmatpush.msra.mxu0 0.0
  %2175 = vmatpush.msra.mxu0 0.0
  %v2176 = vand.u32 %v1535, 4294901760
  %2177 = vmatpush.msra.mxu0 %v2176
  %v2178 = vand.u32 %v1502, 4294901760
  %2179 = vmatpush.msra.mxu0 %v2178
  %v2180 = vand.u32 %v1522, 4294901760
  %2181 = vmatmul.f32.gmra.mxu0 %v2180
  %v2182 = vpop.f32.mrf.mxu0
  %v2183 = vadd.f32 %v2160, %v2182
  %2184 = vdwg.mxu0
  %2185 = vmatpush.msra.mxu0 0.0
  %2186 = vmatpush.msra.mxu0 0.0
  %2187 = vmatpush.msra.mxu0 0.0
  %2188 = vmatpush.msra.mxu0 0.0
  %2189 = vmatpush.msra.mxu0 0.0
  %2190 = vmatpush.msra.mxu0 0.0
  %2191 = vmatpush.msra.mxu0 0.0
  %2192 = vmatpush.msra.mxu0 0.0
  %2193 = vmatpush.msra.mxu0 0.0
  %2194 = vmatpush.msra.mxu0 0.0
  %2195 = vmatpush.msra.mxu0 0.0
  %2196 = vmatpush.msra.mxu0 0.0
  %2197 = vmatpush.msra.mxu0 0.0
  %2198 = vmatpush.msra.mxu0 0.0
  %v2199 = vand.u32 %v1538, 4294901760
  %2200 = vmatpush.msra.mxu0 %v2199
  %v2201 = vand.u32 %v1503, 4294901760
  %2202 = vmatpush.msra.mxu0 %v2201
  %v2203 = vand.u32 %v1522, 4294901760
  %v2204 = vsub.f32 %v1522, %v2203
  %v2205 = vand.u32 %v2204, 4294901760
  %v2206 = vsub.f32 %v2204, %v2205
  %v2207 = vand.u32 %v2206, 4294901760
  %2208 = vmatmul.f32.gmra.mxu0 %v2207
  %v2209 = vpop.f32.mrf.mxu0
  %v2210 = vadd.f32 %v1518, %v2209
  %2211 = vdwg.mxu0
  %2212 = vmatpush.msra.mxu0 0.0
  %2213 = vmatpush.msra.mxu0 0.0
  %2214 = vmatpush.msra.mxu0 0.0
  %2215 = vmatpush.msra.mxu0 0.0
  %2216 = vmatpush.msra.mxu0 0.0
  %2217 = vmatpush.msra.mxu0 0.0
  %2218 = vmatpush.msra.mxu0 0.0
  %2219 = vmatpush.msra.mxu0 0.0
  %2220 = vmatpush.msra.mxu0 0.0
  %2221 = vmatpush.msra.mxu0 0.0
  %2222 = vmatpush.msra.mxu0 0.0
  %2223 = vmatpush.msra.mxu0 0.0
  %2224 = vmatpush.msra.mxu0 0.0
  %2225 = vmatpush.msra.mxu0 0.0
  %v2226 = vand.u32 %v1538, 4294901760
  %v2227 = vsub.f32 %v1538, %v2226
  %v2228 = vand.u32 %v2227, 4294901760
  %v2229 = vsub.f32 %v2227, %v2228
  %v2230 = vand.u32 %v2229, 4294901760
  %2231 = vmatpush.msra.mxu0 %v2230
  %v2232 = vand.u32 %v1503, 4294901760
  %v2233 = vsub.f32 %v1503, %v2232
  %v2234 = vand.u32 %v2233, 4294901760
  %v2235 = vsub.f32 %v2233, %v2234
  %v2236 = vand.u32 %v2235, 4294901760
  %2237 = vmatpush.msra.mxu0 %v2236
  %v2238 = vand.u32 %v1522, 4294901760
  %2239 = vmatmul.f32.gmra.mxu0 %v2238
  %v2240 = vpop.f32.mrf.mxu0
  %v2241 = vadd.f32 %v2210, %v2240
  %2242 = vdwg.mxu0
  %2243 = vmatpush.msra.mxu0 0.0
  %2244 = vmatpush.msra.mxu0 0.0
  %2245 = vmatpush.msra.mxu0 0.0
  %2246 = vmatpush.msra.mxu0 0.0
  %2247 = vmatpush.msra.mxu0 0.0
  %2248 = vmatpush.msra.mxu0 0.0
  %2249 = vmatpush.msra.mxu0 0.0
  %2250 = vmatpush.msra.mxu0 0.0
  %2251 = vmatpush.msra.mxu0 0.0
  %2252 = vmatpush.msra.mxu0 0.0
  %2253 = vmatpush.msra.mxu0 0.0
  %2254 = vmatpush.msra.mxu0 0.0
  %2255 = vmatpush.msra.mxu0 0.0
  %2256 = vmatpush.msra.mxu0 0.0
  %v2257 = vand.u32 %v1538, 4294901760
  %v2258 = vsub.f32 %v1538, %v2257
  %2259 = vmatpush.msra.mxu0 %v2258
  %v2260 = vand.u32 %v1503, 4294901760
  %v2261 = vsub.f32 %v1503, %v2260
  %2262 = vmatpush.msra.mxu0 %v2261
  %v2263 = vand.u32 %v1522, 4294901760
  %v2264 = vsub.f32 %v1522, %v2263
  %2265 = vmatmul.f32.gmra.mxu0 %v2264
  %v2266 = vpop.f32.mrf.mxu0
  %v2267 = vadd.f32 %v2241, %v2266
  %2268 = vdwg.mxu0
  %2269 = vmatpush.msra.mxu0 0.0
  %2270 = vmatpush.msra.mxu0 0.0
  %2271 = vmatpush.msra.mxu0 0.0
  %2272 = vmatpush.msra.mxu0 0.0
  %2273 = vmatpush.msra.mxu0 0.0
  %2274 = vmatpush.msra.mxu0 0.0
  %2275 = vmatpush.msra.mxu0 0.0
  %2276 = vmatpush.msra.mxu0 0.0
  %2277 = vmatpush.msra.mxu0 0.0
  %2278 = vmatpush.msra.mxu0 0.0
  %2279 = vmatpush.msra.mxu0 0.0
  %2280 = vmatpush.msra.mxu0 0.0
  %2281 = vmatpush.msra.mxu0 0.0
  %2282 = vmatpush.msra.mxu0 0.0
  %v2283 = vand.u32 %v1538, 4294901760
  %2284 = vmatpush.msra.mxu0 %v2283
  %v2285 = vand.u32 %v1503, 4294901760
  %2286 = vmatpush.msra.mxu0 %v2285
  %v2287 = vand.u32 %v1522, 4294901760
  %v2288 = vsub.f32 %v1522, %v2287
  %v2289 = vand.u32 %v2288, 4294901760
  %2290 = vmatmul.f32.gmra.mxu0 %v2289
  %v2291 = vpop.f32.mrf.mxu0
  %v2292 = vadd.f32 %v2267, %v2291
  %2293 = vdwg.mxu0
  %2294 = vmatpush.msra.mxu0 0.0
  %2295 = vmatpush.msra.mxu0 0.0
  %2296 = vmatpush.msra.mxu0 0.0
  %2297 = vmatpush.msra.mxu0 0.0
  %2298 = vmatpush.msra.mxu0 0.0
  %2299 = vmatpush.msra.mxu0 0.0
  %2300 = vmatpush.msra.mxu0 0.0
  %2301 = vmatpush.msra.mxu0 0.0
  %2302 = vmatpush.msra.mxu0 0.0
  %2303 = vmatpush.msra.mxu0 0.0
  %2304 = vmatpush.msra.mxu0 0.0
  %2305 = vmatpush.msra.mxu0 0.0
  %2306 = vmatpush.msra.mxu0 0.0
  %2307 = vmatpush.msra.mxu0 0.0
  %v2308 = vand.u32 %v1538, 4294901760
  %v2309 = vsub.f32 %v1538, %v2308
  %v2310 = vand.u32 %v2309, 4294901760
  %2311 = vmatpush.msra.mxu0 %v2310
  %v2312 = vand.u32 %v1503, 4294901760
  %v2313 = vsub.f32 %v1503, %v2312
  %v2314 = vand.u32 %v2313, 4294901760
  %2315 = vmatpush.msra.mxu0 %v2314
  %v2316 = vand.u32 %v1522, 4294901760
  %2317 = vmatmul.f32.gmra.mxu0 %v2316
  %v2318 = vpop.f32.mrf.mxu0
  %v2319 = vadd.f32 %v2292, %v2318
  %2320 = vdwg.mxu0
  %2321 = vmatpush.msra.mxu0 0.0
  %2322 = vmatpush.msra.mxu0 0.0
  %2323 = vmatpush.msra.mxu0 0.0
  %2324 = vmatpush.msra.mxu0 0.0
  %2325 = vmatpush.msra.mxu0 0.0
  %2326 = vmatpush.msra.mxu0 0.0
  %2327 = vmatpush.msra.mxu0 0.0
  %2328 = vmatpush.msra.mxu0 0.0
  %2329 = vmatpush.msra.mxu0 0.0
  %2330 = vmatpush.msra.mxu0 0.0
  %2331 = vmatpush.msra.mxu0 0.0
  %2332 = vmatpush.msra.mxu0 0.0
  %2333 = vmatpush.msra.mxu0 0.0
  %2334 = vmatpush.msra.mxu0 0.0
  %v2335 = vand.u32 %v1538, 4294901760
  %2336 = vmatpush.msra.mxu0 %v2335
  %v2337 = vand.u32 %v1503, 4294901760
  %2338 = vmatpush.msra.mxu0 %v2337
  %v2339 = vand.u32 %v1522, 4294901760
  %2340 = vmatmul.f32.gmra.mxu0 %v2339
  %v2341 = vpop.f32.mrf.mxu0
  %v2342 = vadd.f32 %v2319, %v2341
  %2343 = vdwg.mxu0
  %2344 = vmatpush.msra.mxu0 0.0
  %2345 = vmatpush.msra.mxu0 0.0
  %2346 = vmatpush.msra.mxu0 0.0
  %2347 = vmatpush.msra.mxu0 0.0
  %2348 = vmatpush.msra.mxu0 0.0
  %2349 = vmatpush.msra.mxu0 0.0
  %2350 = vmatpush.msra.mxu0 0.0
  %2351 = vmatpush.msra.mxu0 0.0
  %2352 = vmatpush.msra.mxu0 0.0
  %2353 = vmatpush.msra.mxu0 0.0
  %2354 = vmatpush.msra.mxu0 0.0
  %2355 = vmatpush.msra.mxu0 0.0
  %2356 = vmatpush.msra.mxu0 0.0
  %2357 = vmatpush.msra.mxu0 0.0
  %v2358 = vand.u32 %v1541, 4294901760
  %2359 = vmatpush.msra.mxu0 %v2358
  %v2360 = vand.u32 %v1504, 4294901760
  %2361 = vmatpush.msra.mxu0 %v2360
  %v2362 = vand.u32 %v1522, 4294901760
  %v2363 = vsub.f32 %v1522, %v2362
  %v2364 = vand.u32 %v2363, 4294901760
  %v2365 = vsub.f32 %v2363, %v2364
  %v2366 = vand.u32 %v2365, 4294901760
  %2367 = vmatmul.f32.gmra.mxu0 %v2366
  %v2368 = vpop.f32.mrf.mxu0
  %v2369 = vadd.f32 %v1518, %v2368
  %2370 = vdwg.mxu0
  %2371 = vmatpush.msra.mxu0 0.0
  %2372 = vmatpush.msra.mxu0 0.0
  %2373 = vmatpush.msra.mxu0 0.0
  %2374 = vmatpush.msra.mxu0 0.0
  %2375 = vmatpush.msra.mxu0 0.0
  %2376 = vmatpush.msra.mxu0 0.0
  %2377 = vmatpush.msra.mxu0 0.0
  %2378 = vmatpush.msra.mxu0 0.0
  %2379 = vmatpush.msra.mxu0 0.0
  %2380 = vmatpush.msra.mxu0 0.0
  %2381 = vmatpush.msra.mxu0 0.0
  %2382 = vmatpush.msra.mxu0 0.0
  %2383 = vmatpush.msra.mxu0 0.0
  %2384 = vmatpush.msra.mxu0 0.0
  %v2385 = vand.u32 %v1541, 4294901760
  %v2386 = vsub.f32 %v1541, %v2385
  %v2387 = vand.u32 %v2386, 4294901760
  %v2388 = vsub.f32 %v2386, %v2387
  %v2389 = vand.u32 %v2388, 4294901760
  %2390 = vmatpush.msra.mxu0 %v2389
  %v2391 = vand.u32 %v1504, 4294901760
  %v2392 = vsub.f32 %v1504, %v2391
  %v2393 = vand.u32 %v2392, 4294901760
  %v2394 = vsub.f32 %v2392, %v2393
  %v2395 = vand.u32 %v2394, 4294901760
  %2396 = vmatpush.msra.mxu0 %v2395
  %v2397 = vand.u32 %v1522, 4294901760
  %2398 = vmatmul.f32.gmra.mxu0 %v2397
  %v2399 = vpop.f32.mrf.mxu0
  %v2400 = vadd.f32 %v2369, %v2399
  %2401 = vdwg.mxu0
  %2402 = vmatpush.msra.mxu0 0.0
  %2403 = vmatpush.msra.mxu0 0.0
  %2404 = vmatpush.msra.mxu0 0.0
  %2405 = vmatpush.msra.mxu0 0.0
  %2406 = vmatpush.msra.mxu0 0.0
  %2407 = vmatpush.msra.mxu0 0.0
  %2408 = vmatpush.msra.mxu0 0.0
  %2409 = vmatpush.msra.mxu0 0.0
  %2410 = vmatpush.msra.mxu0 0.0
  %2411 = vmatpush.msra.mxu0 0.0
  %2412 = vmatpush.msra.mxu0 0.0
  %2413 = vmatpush.msra.mxu0 0.0
  %2414 = vmatpush.msra.mxu0 0.0
  %2415 = vmatpush.msra.mxu0 0.0
  %v2416 = vand.u32 %v1541, 4294901760
  %v2417 = vsub.f32 %v1541, %v2416
  %2418 = vmatpush.msra.mxu0 %v2417
  %v2419 = vand.u32 %v1504, 4294901760
  %v2420 = vsub.f32 %v1504, %v2419
  %2421 = vmatpush.msra.mxu0 %v2420
  %v2422 = vand.u32 %v1522, 4294901760
  %v2423 = vsub.f32 %v1522, %v2422
  %2424 = vmatmul.f32.gmra.mxu0 %v2423
  %v2425 = vpop.f32.mrf.mxu0
  %v2426 = vadd.f32 %v2400, %v2425
  %2427 = vdwg.mxu0
  %2428 = vmatpush.msra.mxu0 0.0
  %2429 = vmatpush.msra.mxu0 0.0
  %2430 = vmatpush.msra.mxu0 0.0
  %2431 = vmatpush.msra.mxu0 0.0
  %2432 = vmatpush.msra.mxu0 0.0
  %2433 = vmatpush.msra.mxu0 0.0
  %2434 = vmatpush.msra.mxu0 0.0
  %2435 = vmatpush.msra.mxu0 0.0
  %2436 = vmatpush.msra.mxu0 0.0
  %2437 = vmatpush.msra.mxu0 0.0
  %2438 = vmatpush.msra.mxu0 0.0
  %2439 = vmatpush.msra.mxu0 0.0
  %2440 = vmatpush.msra.mxu0 0.0
  %2441 = vmatpush.msra.mxu0 0.0
  %v2442 = vand.u32 %v1541, 4294901760
  %2443 = vmatpush.msra.mxu0 %v2442
  %v2444 = vand.u32 %v1504, 4294901760
  %2445 = vmatpush.msra.mxu0 %v2444
  %v2446 = vand.u32 %v1522, 4294901760
  %v2447 = vsub.f32 %v1522, %v2446
  %v2448 = vand.u32 %v2447, 4294901760
  %2449 = vmatmul.f32.gmra.mxu0 %v2448
  %v2450 = vpop.f32.mrf.mxu0
  %v2451 = vadd.f32 %v2426, %v2450
  %2452 = vdwg.mxu0
  %2453 = vmatpush.msra.mxu0 0.0
  %2454 = vmatpush.msra.mxu0 0.0
  %2455 = vmatpush.msra.mxu0 0.0
  %2456 = vmatpush.msra.mxu0 0.0
  %2457 = vmatpush.msra.mxu0 0.0
  %2458 = vmatpush.msra.mxu0 0.0
  %2459 = vmatpush.msra.mxu0 0.0
  %2460 = vmatpush.msra.mxu0 0.0
  %2461 = vmatpush.msra.mxu0 0.0
  %2462 = vmatpush.msra.mxu0 0.0
  %2463 = vmatpush.msra.mxu0 0.0
  %2464 = vmatpush.msra.mxu0 0.0
  %2465 = vmatpush.msra.mxu0 0.0
  %2466 = vmatpush.msra.mxu0 0.0
  %v2467 = vand.u32 %v1541, 4294901760
  %v2468 = vsub.f32 %v1541, %v2467
  %v2469 = vand.u32 %v2468, 4294901760
  %2470 = vmatpush.msra.mxu0 %v2469
  %v2471 = vand.u32 %v1504, 4294901760
  %v2472 = vsub.f32 %v1504, %v2471
  %v2473 = vand.u32 %v2472, 4294901760
  %2474 = vmatpush.msra.mxu0 %v2473
  %v2475 = vand.u32 %v1522, 4294901760
  %2476 = vmatmul.f32.gmra.mxu0 %v2475
  %v2477 = vpop.f32.mrf.mxu0
  %v2478 = vadd.f32 %v2451, %v2477
  %2479 = vdwg.mxu0
  %2480 = vmatpush.msra.mxu0 0.0
  %2481 = vmatpush.msra.mxu0 0.0
  %2482 = vmatpush.msra.mxu0 0.0
  %2483 = vmatpush.msra.mxu0 0.0
  %2484 = vmatpush.msra.mxu0 0.0
  %2485 = vmatpush.msra.mxu0 0.0
  %2486 = vmatpush.msra.mxu0 0.0
  %2487 = vmatpush.msra.mxu0 0.0
  %2488 = vmatpush.msra.mxu0 0.0
  %2489 = vmatpush.msra.mxu0 0.0
  %2490 = vmatpush.msra.mxu0 0.0
  %2491 = vmatpush.msra.mxu0 0.0
  %2492 = vmatpush.msra.mxu0 0.0
  %2493 = vmatpush.msra.mxu0 0.0
  %v2494 = vand.u32 %v1541, 4294901760
  %2495 = vmatpush.msra.mxu0 %v2494
  %v2496 = vand.u32 %v1504, 4294901760
  %2497 = vmatpush.msra.mxu0 %v2496
  %v2498 = vand.u32 %v1522, 4294901760
  %2499 = vmatmul.f32.gmra.mxu0 %v2498
  %v2500 = vpop.f32.mrf.mxu0
  %v2501 = vadd.f32 %v2478, %v2500
  %2502 = vdwg.mxu0
  %2503 = vmatpush.msra.mxu0 0.0
  %2504 = vmatpush.msra.mxu0 0.0
  %2505 = vmatpush.msra.mxu0 0.0
  %2506 = vmatpush.msra.mxu0 0.0
  %2507 = vmatpush.msra.mxu0 0.0
  %2508 = vmatpush.msra.mxu0 0.0
  %2509 = vmatpush.msra.mxu0 0.0
  %2510 = vmatpush.msra.mxu0 0.0
  %2511 = vmatpush.msra.mxu0 0.0
  %2512 = vmatpush.msra.mxu0 0.0
  %2513 = vmatpush.msra.mxu0 0.0
  %2514 = vmatpush.msra.mxu0 0.0
  %2515 = vmatpush.msra.mxu0 0.0
  %2516 = vmatpush.msra.mxu0 0.0
  %v2517 = vand.u32 %v1544, 4294901760
  %2518 = vmatpush.msra.mxu0 %v2517
  %v2519 = vand.u32 %v1505, 4294901760
  %2520 = vmatpush.msra.mxu0 %v2519
  %v2521 = vand.u32 %v1522, 4294901760
  %v2522 = vsub.f32 %v1522, %v2521
  %v2523 = vand.u32 %v2522, 4294901760
  %v2524 = vsub.f32 %v2522, %v2523
  %v2525 = vand.u32 %v2524, 4294901760
  %2526 = vmatmul.f32.gmra.mxu0 %v2525
  %v2527 = vpop.f32.mrf.mxu0
  %v2528 = vadd.f32 %v1518, %v2527
  %2529 = vdwg.mxu0
  %2530 = vmatpush.msra.mxu0 0.0
  %2531 = vmatpush.msra.mxu0 0.0
  %2532 = vmatpush.msra.mxu0 0.0
  %2533 = vmatpush.msra.mxu0 0.0
  %2534 = vmatpush.msra.mxu0 0.0
  %2535 = vmatpush.msra.mxu0 0.0
  %2536 = vmatpush.msra.mxu0 0.0
  %2537 = vmatpush.msra.mxu0 0.0
  %2538 = vmatpush.msra.mxu0 0.0
  %2539 = vmatpush.msra.mxu0 0.0
  %2540 = vmatpush.msra.mxu0 0.0
  %2541 = vmatpush.msra.mxu0 0.0
  %2542 = vmatpush.msra.mxu0 0.0
  %2543 = vmatpush.msra.mxu0 0.0
  %v2544 = vand.u32 %v1544, 4294901760
  %v2545 = vsub.f32 %v1544, %v2544
  %v2546 = vand.u32 %v2545, 4294901760
  %v2547 = vsub.f32 %v2545, %v2546
  %v2548 = vand.u32 %v2547, 4294901760
  %2549 = vmatpush.msra.mxu0 %v2548
  %v2550 = vand.u32 %v1505, 4294901760
  %v2551 = vsub.f32 %v1505, %v2550
  %v2552 = vand.u32 %v2551, 4294901760
  %v2553 = vsub.f32 %v2551, %v2552
  %v2554 = vand.u32 %v2553, 4294901760
  %2555 = vmatpush.msra.mxu0 %v2554
  %v2556 = vand.u32 %v1522, 4294901760
  %2557 = vmatmul.f32.gmra.mxu0 %v2556
  %v2558 = vpop.f32.mrf.mxu0
  %v2559 = vadd.f32 %v2528, %v2558
  %2560 = vdwg.mxu0
  %2561 = vmatpush.msra.mxu0 0.0
  %2562 = vmatpush.msra.mxu0 0.0
  %2563 = vmatpush.msra.mxu0 0.0
  %2564 = vmatpush.msra.mxu0 0.0
  %2565 = vmatpush.msra.mxu0 0.0
  %2566 = vmatpush.msra.mxu0 0.0
  %2567 = vmatpush.msra.mxu0 0.0
  %2568 = vmatpush.msra.mxu0 0.0
  %2569 = vmatpush.msra.mxu0 0.0
  %2570 = vmatpush.msra.mxu0 0.0
  %2571 = vmatpush.msra.mxu0 0.0
  %2572 = vmatpush.msra.mxu0 0.0
  %2573 = vmatpush.msra.mxu0 0.0
  %2574 = vmatpush.msra.mxu0 0.0
  %v2575 = vand.u32 %v1544, 4294901760
  %v2576 = vsub.f32 %v1544, %v2575
  %2577 = vmatpush.msra.mxu0 %v2576
  %v2578 = vand.u32 %v1505, 4294901760
  %v2579 = vsub.f32 %v1505, %v2578
  %2580 = vmatpush.msra.mxu0 %v2579
  %v2581 = vand.u32 %v1522, 4294901760
  %v2582 = vsub.f32 %v1522, %v2581
  %2583 = vmatmul.f32.gmra.mxu0 %v2582
  %v2584 = vpop.f32.mrf.mxu0
  %v2585 = vadd.f32 %v2559, %v2584
  %2586 = vdwg.mxu0
  %2587 = vmatpush.msra.mxu0 0.0
  %2588 = vmatpush.msra.mxu0 0.0
  %2589 = vmatpush.msra.mxu0 0.0
  %2590 = vmatpush.msra.mxu0 0.0
  %2591 = vmatpush.msra.mxu0 0.0
  %2592 = vmatpush.msra.mxu0 0.0
  %2593 = vmatpush.msra.mxu0 0.0
  %2594 = vmatpush.msra.mxu0 0.0
  %2595 = vmatpush.msra.mxu0 0.0
  %2596 = vmatpush.msra.mxu0 0.0
  %2597 = vmatpush.msra.mxu0 0.0
  %2598 = vmatpush.msra.mxu0 0.0
  %2599 = vmatpush.msra.mxu0 0.0
  %2600 = vmatpush.msra.mxu0 0.0
  %v2601 = vand.u32 %v1544, 4294901760
  %2602 = vmatpush.msra.mxu0 %v2601
  %v2603 = vand.u32 %v1505, 4294901760
  %2604 = vmatpush.msra.mxu0 %v2603
  %v2605 = vand.u32 %v1522, 4294901760
  %v2606 = vsub.f32 %v1522, %v2605
  %v2607 = vand.u32 %v2606, 4294901760
  %2608 = vmatmul.f32.gmra.mxu0 %v2607
  %v2609 = vpop.f32.mrf.mxu0
  %v2610 = vadd.f32 %v2585, %v2609
  %2611 = vdwg.mxu0
  %2612 = vmatpush.msra.mxu0 0.0
  %2613 = vmatpush.msra.mxu0 0.0
  %2614 = vmatpush.msra.mxu0 0.0
  %2615 = vmatpush.msra.mxu0 0.0
  %2616 = vmatpush.msra.mxu0 0.0
  %2617 = vmatpush.msra.mxu0 0.0
  %2618 = vmatpush.msra.mxu0 0.0
  %2619 = vmatpush.msra.mxu0 0.0
  %2620 = vmatpush.msra.mxu0 0.0
  %2621 = vmatpush.msra.mxu0 0.0
  %2622 = vmatpush.msra.mxu0 0.0
  %2623 = vmatpush.msra.mxu0 0.0
  %2624 = vmatpush.msra.mxu0 0.0
  %2625 = vmatpush.msra.mxu0 0.0
  %v2626 = vand.u32 %v1544, 4294901760
  %v2627 = vsub.f32 %v1544, %v2626
  %v2628 = vand.u32 %v2627, 4294901760
  %2629 = vmatpush.msra.mxu0 %v2628
  %v2630 = vand.u32 %v1505, 4294901760
  %v2631 = vsub.f32 %v1505, %v2630
  %v2632 = vand.u32 %v2631, 4294901760
  %2633 = vmatpush.msra.mxu0 %v2632
  %v2634 = vand.u32 %v1522, 4294901760
  %2635 = vmatmul.f32.gmra.mxu0 %v2634
  %v2636 = vpop.f32.mrf.mxu0
  %v2637 = vadd.f32 %v2610, %v2636
  %2638 = vdwg.mxu0
  %2639 = vmatpush.msra.mxu0 0.0
  %2640 = vmatpush.msra.mxu0 0.0
  %2641 = vmatpush.msra.mxu0 0.0
  %2642 = vmatpush.msra.mxu0 0.0
  %2643 = vmatpush.msra.mxu0 0.0
  %2644 = vmatpush.msra.mxu0 0.0
  %2645 = vmatpush.msra.mxu0 0.0
  %2646 = vmatpush.msra.mxu0 0.0
  %2647 = vmatpush.msra.mxu0 0.0
  %2648 = vmatpush.msra.mxu0 0.0
  %2649 = vmatpush.msra.mxu0 0.0
  %2650 = vmatpush.msra.mxu0 0.0
  %2651 = vmatpush.msra.mxu0 0.0
  %2652 = vmatpush.msra.mxu0 0.0
  %v2653 = vand.u32 %v1544, 4294901760
  %2654 = vmatpush.msra.mxu0 %v2653
  %v2655 = vand.u32 %v1505, 4294901760
  %2656 = vmatpush.msra.mxu0 %v2655
  %v2657 = vand.u32 %v1522, 4294901760
  %2658 = vmatmul.f32.gmra.mxu0 %v2657
  %v2659 = vpop.f32.mrf.mxu0
  %v2660 = vadd.f32 %v2637, %v2659
  %2661 = vdwg.mxu0
  %2662 = vmatpush.msra.mxu0 0.0
  %2663 = vmatpush.msra.mxu0 0.0
  %2664 = vmatpush.msra.mxu0 0.0
  %2665 = vmatpush.msra.mxu0 0.0
  %2666 = vmatpush.msra.mxu0 0.0
  %2667 = vmatpush.msra.mxu0 0.0
  %2668 = vmatpush.msra.mxu0 0.0
  %2669 = vmatpush.msra.mxu0 0.0
  %2670 = vmatpush.msra.mxu0 0.0
  %2671 = vmatpush.msra.mxu0 0.0
  %2672 = vmatpush.msra.mxu0 0.0
  %2673 = vmatpush.msra.mxu0 0.0
  %2674 = vmatpush.msra.mxu0 0.0
  %2675 = vmatpush.msra.mxu0 0.0
  %v2676 = vand.u32 %v1547, 4294901760
  %2677 = vmatpush.msra.mxu0 %v2676
  %v2678 = vand.u32 %v1506, 4294901760
  %2679 = vmatpush.msra.mxu0 %v2678
  %v2680 = vand.u32 %v1522, 4294901760
  %v2681 = vsub.f32 %v1522, %v2680
  %v2682 = vand.u32 %v2681, 4294901760
  %v2683 = vsub.f32 %v2681, %v2682
  %v2684 = vand.u32 %v2683, 4294901760
  %2685 = vmatmul.f32.gmra.mxu0 %v2684
  %v2686 = vpop.f32.mrf.mxu0
  %v2687 = vadd.f32 %v1518, %v2686
  %2688 = vdwg.mxu0
  %2689 = vmatpush.msra.mxu0 0.0
  %2690 = vmatpush.msra.mxu0 0.0
  %2691 = vmatpush.msra.mxu0 0.0
  %2692 = vmatpush.msra.mxu0 0.0
  %2693 = vmatpush.msra.mxu0 0.0
  %2694 = vmatpush.msra.mxu0 0.0
  %2695 = vmatpush.msra.mxu0 0.0
  %2696 = vmatpush.msra.mxu0 0.0
  %2697 = vmatpush.msra.mxu0 0.0
  %2698 = vmatpush.msra.mxu0 0.0
  %2699 = vmatpush.msra.mxu0 0.0
  %2700 = vmatpush.msra.mxu0 0.0
  %2701 = vmatpush.msra.mxu0 0.0
  %2702 = vmatpush.msra.mxu0 0.0
  %v2703 = vand.u32 %v1547, 4294901760
  %v2704 = vsub.f32 %v1547, %v2703
  %v2705 = vand.u32 %v2704, 4294901760
  %v2706 = vsub.f32 %v2704, %v2705
  %v2707 = vand.u32 %v2706, 4294901760
  %2708 = vmatpush.msra.mxu0 %v2707
  %v2709 = vand.u32 %v1506, 4294901760
  %v2710 = vsub.f32 %v1506, %v2709
  %v2711 = vand.u32 %v2710, 4294901760
  %v2712 = vsub.f32 %v2710, %v2711
  %v2713 = vand.u32 %v2712, 4294901760
  %2714 = vmatpush.msra.mxu0 %v2713
  %v2715 = vand.u32 %v1522, 4294901760
  %2716 = vmatmul.f32.gmra.mxu0 %v2715
  %v2717 = vpop.f32.mrf.mxu0
  %v2718 = vadd.f32 %v2687, %v2717
  %2719 = vdwg.mxu0
  %2720 = vmatpush.msra.mxu0 0.0
  %2721 = vmatpush.msra.mxu0 0.0
  %2722 = vmatpush.msra.mxu0 0.0
  %2723 = vmatpush.msra.mxu0 0.0
  %2724 = vmatpush.msra.mxu0 0.0
  %2725 = vmatpush.msra.mxu0 0.0
  %2726 = vmatpush.msra.mxu0 0.0
  %2727 = vmatpush.msra.mxu0 0.0
  %2728 = vmatpush.msra.mxu0 0.0
  %2729 = vmatpush.msra.mxu0 0.0
  %2730 = vmatpush.msra.mxu0 0.0
  %2731 = vmatpush.msra.mxu0 0.0
  %2732 = vmatpush.msra.mxu0 0.0
  %2733 = vmatpush.msra.mxu0 0.0
  %v2734 = vand.u32 %v1547, 4294901760
  %v2735 = vsub.f32 %v1547, %v2734
  %2736 = vmatpush.msra.mxu0 %v2735
  %v2737 = vand.u32 %v1506, 4294901760
  %v2738 = vsub.f32 %v1506, %v2737
  %2739 = vmatpush.msra.mxu0 %v2738
  %v2740 = vand.u32 %v1522, 4294901760
  %v2741 = vsub.f32 %v1522, %v2740
  %2742 = vmatmul.f32.gmra.mxu0 %v2741
  %v2743 = vpop.f32.mrf.mxu0
  %v2744 = vadd.f32 %v2718, %v2743
  %2745 = vdwg.mxu0
  %2746 = vmatpush.msra.mxu0 0.0
  %2747 = vmatpush.msra.mxu0 0.0
  %2748 = vmatpush.msra.mxu0 0.0
  %2749 = vmatpush.msra.mxu0 0.0
  %2750 = vmatpush.msra.mxu0 0.0
  %2751 = vmatpush.msra.mxu0 0.0
  %2752 = vmatpush.msra.mxu0 0.0
  %2753 = vmatpush.msra.mxu0 0.0
  %2754 = vmatpush.msra.mxu0 0.0
  %2755 = vmatpush.msra.mxu0 0.0
  %2756 = vmatpush.msra.mxu0 0.0
  %2757 = vmatpush.msra.mxu0 0.0
  %2758 = vmatpush.msra.mxu0 0.0
  %2759 = vmatpush.msra.mxu0 0.0
  %v2760 = vand.u32 %v1547, 4294901760
  %2761 = vmatpush.msra.mxu0 %v2760
  %v2762 = vand.u32 %v1506, 4294901760
  %2763 = vmatpush.msra.mxu0 %v2762
  %v2764 = vand.u32 %v1522, 4294901760
  %v2765 = vsub.f32 %v1522, %v2764
  %v2766 = vand.u32 %v2765, 4294901760
  %2767 = vmatmul.f32.gmra.mxu0 %v2766
  %v2768 = vpop.f32.mrf.mxu0
  %v2769 = vadd.f32 %v2744, %v2768
  %2770 = vdwg.mxu0
  %2771 = vmatpush.msra.mxu0 0.0
  %2772 = vmatpush.msra.mxu0 0.0
  %2773 = vmatpush.msra.mxu0 0.0
  %2774 = vmatpush.msra.mxu0 0.0
  %2775 = vmatpush.msra.mxu0 0.0
  %2776 = vmatpush.msra.mxu0 0.0
  %2777 = vmatpush.msra.mxu0 0.0
  %2778 = vmatpush.msra.mxu0 0.0
  %2779 = vmatpush.msra.mxu0 0.0
  %2780 = vmatpush.msra.mxu0 0.0
  %2781 = vmatpush.msra.mxu0 0.0
  %2782 = vmatpush.msra.mxu0 0.0
  %2783 = vmatpush.msra.mxu0 0.0
  %2784 = vmatpush.msra.mxu0 0.0
  %v2785 = vand.u32 %v1547, 4294901760
  %v2786 = vsub.f32 %v1547, %v2785
  %v2787 = vand.u32 %v2786, 4294901760
  %2788 = vmatpush.msra.mxu0 %v2787
  %v2789 = vand.u32 %v1506, 4294901760
  %v2790 = vsub.f32 %v1506, %v2789
  %v2791 = vand.u32 %v2790, 4294901760
  %2792 = vmatpush.msra.mxu0 %v2791
  %v2793 = vand.u32 %v1522, 4294901760
  %2794 = vmatmul.f32.gmra.mxu0 %v2793
  %v2795 = vpop.f32.mrf.mxu0
  %v2796 = vadd.f32 %v2769, %v2795
  %2797 = vdwg.mxu0
  %2798 = vmatpush.msra.mxu0 0.0
  %2799 = vmatpush.msra.mxu0 0.0
  %2800 = vmatpush.msra.mxu0 0.0
  %2801 = vmatpush.msra.mxu0 0.0
  %2802 = vmatpush.msra.mxu0 0.0
  %2803 = vmatpush.msra.mxu0 0.0
  %2804 = vmatpush.msra.mxu0 0.0
  %2805 = vmatpush.msra.mxu0 0.0
  %2806 = vmatpush.msra.mxu0 0.0
  %2807 = vmatpush.msra.mxu0 0.0
  %2808 = vmatpush.msra.mxu0 0.0
  %2809 = vmatpush.msra.mxu0 0.0
  %2810 = vmatpush.msra.mxu0 0.0
  %2811 = vmatpush.msra.mxu0 0.0
  %v2812 = vand.u32 %v1547, 4294901760
  %2813 = vmatpush.msra.mxu0 %v2812
  %v2814 = vand.u32 %v1506, 4294901760
  %2815 = vmatpush.msra.mxu0 %v2814
  %v2816 = vand.u32 %v1522, 4294901760
  %2817 = vmatmul.f32.gmra.mxu0 %v2816
  %v2818 = vpop.f32.mrf.mxu0
  %v2819 = vadd.f32 %v2796, %v2818
  %2820 = vdwg.mxu0
  %v2829 = vrot.slane %v1865, 4
  %v2830 = vrot.slane %v2183, 4
  %v2831 = vrot.slane %v2501, 4
  %v2832 = vrot.slane %v2819, 4
  %v2833 = vsel %vm66, %v1706, %v2829
  %v2834 = vsel %vm66, %v2024, %v2830
  %v2835 = vsel %vm66, %v2342, %v2831
  %v2836 = vsel %vm66, %v2660, %v2832
  %2841 = vst [vmem:[%s5] sm:$0x77] %v2833
  %2842 = vst [vmem:[%s5 + $0x8] sm:$0x77] %v2834
  %2843 = vst [vmem:[%s5 + $0x10] sm:$0x77] %v2835
  %2844 = vst [vmem:[%s5 + $0x18] sm:$0x77] %v2836
  // Predicated region
  $region22: #{irisnet_forward_feature_major.1} parent=0 // pred_check
    _
  $region23: #{irisnet_forward_feature_major.1} parent=0 // pred_check_branch
    %2846 = sbr.rel (0) target = $region25
  $region24: #{irisnet_forward_feature_major.1} parent=0 // pred_region
    _
  $region25: #{irisnet_forward_feature_major.1} parent=0 // pred_fallthru
    _
  // Predicated region
  $region26: #{irisnet_forward_feature_major.1} parent=0 // pred_check
    _
  $region27: #{irisnet_forward_feature_major.1} parent=0 // pred_check_branch
    %2848 = sbr.rel (0) target = $region29
  $region28: #{irisnet_forward_feature_major.1} parent=0 // pred_region
    _
  $region29: #{irisnet_forward_feature_major.1} parent=0 // pred_fallthru
    _

</llo_original>
